<compile_context>
chip_gen: v7x
topology: tpu7x:2x2x1
jax: 0.10.0
libtpu: 0.0.40
codegen_flags: <defaults>
</compile_context>

<pallas_src>
import functools
import math

import jax
import jax.numpy as jnp
from jax.experimental import pallas as pl
from jax.experimental.pallas import tpu as pltpu


# ----------------------------- shared math ---------------------------------
_GELU_C = math.sqrt(2.0 / math.pi)


def _gelu_tanh(v):
    return 0.5 * v * (1.0 + jnp.tanh(_GELU_C * (v + 0.044715 * v * v * v)))


def _softplus(v):
    return jnp.maximum(v, 0.0) + jnp.log1p(jnp.exp(-jnp.abs(v)))


def _sigmoid_ref(v):                       # pure-JAX reference only
    return 1.0 / (1.0 + jnp.exp(-v))


def _sigmoid_fast(v):                      # kernel: exp on EUP + approx recip
    return pl.reciprocal(1.0 + jnp.exp(-v), approx=True)


def _sigmoid_exact(v):                     # kernel: exact (for the decay gate)
    return 1.0 / (1.0 + jnp.exp(-v))


# ------------------------------ the kernel ----------------------------------
def _recurrent_block_kernel(
    # inputs
    x_ref, wyx_ref, byx_ref, cw_ref, cb_ref, wg_ref, bg_ref, ac_ref, notb_ref,
    # outputs
    out_ref, conv_state_ref, h_state_ref,
    # scratch (persists across the time-chunk grid axis)
    xe_ref,     # (HP + Tc, L) f32: [conv-input history | current chunk linear_x]
    ne_ref,     # (HP + Tc, 1) f32: [boundary-mask history | current chunk]
    hc_ref,     # (1, L)       f32: RG-LRU hidden state carried across chunks
    gates_ref,  # (Tc, 2L)     f32: [gate_x | gate_a] pre-activations
):
    t_idx = pl.program_id(1)
    _, Tc, W = x_ref.shape
    L = wyx_ref.shape[1] // 2
    K = cw_ref.shape[0]
    H, bw, _ = wg_ref.shape
    HP = xe_ref.shape[0] - Tc            # sublane-aligned history pad (>= K-1)

    # ---- reset carried state at the start of every sequence (chunk 0) ----
    @pl.when(t_idx == 0)
    def _():
        xe_ref[0:HP, :] = jnp.zeros((HP, L), jnp.float32)
        ne_ref[0:HP, :] = jnp.ones((HP, 1), jnp.float32)
        hc_ref[...] = jnp.zeros((1, L), jnp.float32)

    x2 = x_ref[...].reshape(Tc, W)                      # bf16 MXU operand
    notb = notb_ref[...].reshape(Tc, 1)                 # 1.0 where segment_pos != 0
    notb_l = jnp.broadcast_to(notb, (Tc, L))            # hoisted lane-broadcast

    # ---- fused linear_y || linear_x (one bf16 MXU matmul, f32 accumulate) ----
    yx = (jnp.dot(x2, wyx_ref[...], preferred_element_type=jnp.float32)
          + byx_ref[...])                               # (Tc, 2L) f32
    y = _gelu_tanh(yx[:, :L])                           # gelu(tanh) branch
    xb = yx[:, L:]                                      # conv / RG-LRU branch

    # ---- causal depthwise temporal conv with document-boundary masking ----
    # conv[t] = b + sum_k w[K-1-k] * xb[t-k] * prod_{j<k} notb[t-j]; rows from
    # before this chunk come from the carried scratch (static slices only).
    xe_ref[HP:HP + Tc, :] = xb
    ne_ref[HP:HP + Tc, :] = notb
    conv = xb * cw_ref[K - 1:K, :]
    cum_mask = notb_l
    for k in range(1, K):
        xs = xe_ref[HP - k:HP - k + Tc, :]
        conv = conv + xs * cum_mask * cw_ref[K - 1 - k:K - k, :]
        if k + 1 < K:
            cum_mask = cum_mask * ne_ref[HP - k:HP - k + Tc, :]
    conv = conv + cb_ref[...]
    # aligned (full HP-row) history writeback for the next chunk: unmasked vst,
    # only the last K-1 rows are ever read.
    xe_ref[0:HP, :] = xb[Tc - HP:, :]
    ne_ref[0:HP, :] = notb[Tc - HP:, :]

    # ---- RG-LRU gates: fused per-head block-diagonal matmuls ----
    # wg[h] = [wi[h] | wa[h]] -> one (Tc, 2*bw) dot per head, written straight
    # into the (Tc, 2L) scratch (gate_x lanes [0, L), gate_a lanes [L, 2L)).
    conv_bf = conv.astype(jnp.bfloat16)
    for h in range(H):
        g = jnp.dot(conv_bf[:, h * bw:(h + 1) * bw], wg_ref[h],
                    preferred_element_type=jnp.float32)          # (Tc, 2*bw)
        gates_ref[:, h * bw:(h + 1) * bw] = g[:, :bw]
        gates_ref[:, L + h * bw:L + (h + 1) * bw] = g[:, bw:]
    gates = gates_ref[...] + bg_ref[...]
    gate_x = _sigmoid_fast(gates[:, :L])
    # exact sigmoid for gate_a: its error compounds through exp(log_a) over the
    # whole sequence (validate approx variants at production T before using).
    gate_a = _sigmoid_exact(gates[:, L:])

    # ---- RG-LRU elementwise section (f32) ----
    a = jnp.exp(gate_a * ac_ref[...])                   # ac = -8*softplus(a_param)
    a_sq = a * a                                        # avoids a second exp
    mult = jnp.sqrt(jnp.maximum(1.0 - a_sq, 0.0))       # clamp -> no NaN at a ~ 1
    mult = (1.0 - notb_l) + notb_l * mult               # reset positions -> 1.0
    x_in = conv * gate_x * mult
    a_eff = a * notb_l                                  # a * (1 - reset)

    # ---- linear recurrence h_t = a_t*h_{t-1} + x_t as a log2(Tc) scan ----
    # Hillis-Steele scan, op (A1,X1)o(A2,X2) = (A1*A2, A2*X1 + X2); shift-down
    # by s with identity fill is built from [fill_block ; v[:Tc-s]] (static,
    # direction-unambiguous sublane shift).
    aa, xx = a_eff, x_in
    s = 1
    while s < Tc:
        a_sh = jnp.concatenate(
            [jnp.ones((s, L), jnp.float32), aa[:Tc - s, :]], axis=0)
        x_sh = jnp.concatenate(
            [jnp.zeros((s, L), jnp.float32), xx[:Tc - s, :]], axis=0)
        xx = aa * x_sh + xx
        aa = aa * a_sh
        s *= 2
    h_all = xx + aa * hc_ref[...]                       # fold in carried state
    h_last = h_all[Tc - 1:Tc, :]
    hc_ref[...] = h_last

    # ---- gate by gelu(linear_y(x)); single dense lane-aligned store ----
    out_ref[...] = (h_all * y).reshape(1, Tc, L).astype(out_ref.dtype)

    # caches (return_cache=True): only written on the final time chunk
    @pl.when(t_idx == pl.num_programs(1) - 1)
    def _():
        conv_state_ref[...] = xb[Tc - (K - 1):, :].reshape(1, K - 1, L).astype(
            conv_state_ref.dtype)
        h_state_ref[...] = h_last.reshape(1, 1, L)
    # TODO(synk): decode-mode (cache is not None) path is not implemented; this
    # kernel covers the prefill/training forward (cache=None) exactly.


# ------------------------------ wrapper --------------------------------------
def _const_spec(shape, *, single_buffer=False):
    index_map = lambda b, t: (0,) * len(shape)
    if single_buffer:
        # Resident weights need no double-buffering; halves their VMEM footprint
        # (critical at production sizes on v7x's 64 MiB VMEM).
        return pl.BlockSpec(shape, index_map, pipeline_mode=pl.Buffered(1))
    return pl.BlockSpec(shape, index_map)


def _vmem_limit_bytes():
    # Size the scoped VMEM limit per chip generation, leaving pipeline headroom:
    # ~96 MiB on v5e/v6e (128 MiB physical), ~48 MiB on v7x (64 MiB physical).
    try:
        cap = pltpu.get_tpu_info().vmem_capacity_bytes
    except Exception:
        cap = 64 * 1024 * 1024
    return int(min(cap - 16 * 1024 * 1024, 96 * 1024 * 1024))


@functools.partial(
    jax.jit, static_argnames=("t_chunk", "out_dtype", "single_buffer_weights"))
def recurrent_block_forward(x, segment_pos, params, *, t_chunk=None,
                            out_dtype=jnp.bfloat16,
                            single_buffer_weights=False):
    B, T, W = x.shape
    L = params["wy"].shape[1]
    K = params["conv_w"].shape[0]
    H, bw, _ = params["wi"].shape
    if t_chunk is None:
        # Large time tiles fill the MXU M dimension and amortize per-grid-step
        # overhead (use ~128 on v5e, 256 on v6e/v7x).
        t_chunk = max(8, min(256, T))
    assert T % t_chunk == 0 and t_chunk % 8 == 0 and t_chunk >= 8
    assert L % 128 == 0 and L == H * bw
    HP = 8                                   # sublane-aligned conv-history pad
    assert K - 1 <= HP

    f32, bf16 = jnp.float32, jnp.bfloat16
    notb = (segment_pos != 0).astype(f32)[..., None]                 # (B, T, 1)

    # Fused weights (built once per trace; bf16 MXU operands, f32 biases).
    w_yx = jnp.concatenate([params["wy"], params["wx"]], axis=1).astype(bf16)
    b_yx = jnp.concatenate([params["by"], params["bx"]]).reshape(1, 2 * L).astype(f32)
    w_g = jnp.concatenate([params["wi"], params["wa"]], axis=-1).astype(bf16)
    b_g = jnp.concatenate(
        [params["bi"].reshape(L), params["ba"].reshape(L)]).reshape(1, 2 * L).astype(f32)
    a_coef = (-8.0 * _softplus(params["a_param"])).reshape(1, L).astype(f32)

    in_arrays = (
        x.astype(bf16),
        w_yx, b_yx,
        params["conv_w"].astype(f32), params["conv_b"].reshape(1, L).astype(f32),
        w_g, b_g,
        a_coef,
        notb,
    )

    const = functools.partial(_const_spec, single_buffer=single_buffer_weights)
    grid = (B, T // t_chunk)
    in_specs = [
        pl.BlockSpec((1, t_chunk, W), lambda b, t: (b, t, 0)),    # x (streamed)
        const((W, 2 * L)), const((1, 2 * L)),                     # fused wy||wx
        const((K, L)), const((1, L)),                             # conv w, b
        const((H, bw, 2 * bw)), const((1, 2 * L)),                # fused wi||wa
        const((1, L)),                                            # -8*softplus(a)
        pl.BlockSpec((1, t_chunk, 1), lambda b, t: (b, t, 0)),    # notb (streamed)
    ]
    out_specs = (
        pl.BlockSpec((1, t_chunk, L), lambda b, t: (b, t, 0)),    # block output
        pl.BlockSpec((1, K - 1, L), lambda b, t: (b, 0, 0)),      # conv1d cache
        pl.BlockSpec((1, 1, L), lambda b, t: (b, 0, 0)),          # rg_lru cache
    )
    out_shape = (
        jax.ShapeDtypeStruct((B, T, L), out_dtype),
        jax.ShapeDtypeStruct((B, K - 1, L), f32),
        jax.ShapeDtypeStruct((B, 1, L), f32),
    )
    scratch_shapes = [
        pltpu.VMEM((HP + t_chunk, L), f32),      # conv input + history
        pltpu.VMEM((HP + t_chunk, 1), f32),      # boundary mask + history
        pltpu.VMEM((1, L), f32),                 # carried RG-LRU state
        pltpu.VMEM((t_chunk, 2 * L), f32),       # fused gate pre-activations
    ]

    # TODO(synk): for v7x B==1 prefill, add a second "parallel" grid axis that
    # splits L by head-groups (and wy/wx along N) so both TensorCores are used;
    # the time axis must stay innermost and "arbitrary" for the carried state.
    out, conv_state, h_state = pl.pallas_call(
        _recurrent_block_kernel,
        out_shape=out_shape,
        grid_spec=pltpu.PrefetchScalarGridSpec(
            num_scalar_prefetch=0,
            grid=grid,
            in_specs=in_specs,
            out_specs=out_specs,
            scratch_shapes=scratch_shapes),
        compiler_params=pltpu.CompilerParams(
            dimension_semantics=("parallel", "arbitrary"),
            vmem_limit_bytes=_vmem_limit_bytes()),
    )(*in_arrays)
    return out, (h_state.reshape(B, L), conv_state)


# ----------------------- deterministic parameter init ------------------------
def init_params(key, width, num_heads, lru_width, temporal_width):
    L = lru_width
    bw = L // num_heads
    ks = jax.random.split(key, 6)
    f32 = jnp.float32
    params = dict(
        wy=jax.random.normal(ks[0], (width, L), f32) * math.sqrt(1.0 / width),
        by=jnp.zeros((L,), f32),
        wx=jax.random.normal(ks[1], (width, L), f32) * math.sqrt(1.0 / width),
        bx=jnp.zeros((L,), f32),
        conv_w=jax.random.normal(ks[2], (temporal_width, L), f32)
        * math.sqrt(0.01 / temporal_width),
        conv_b=jnp.zeros((L,), f32),
        wi=jax.random.normal(ks[3], (num_heads, bw, bw), f32) * math.sqrt(1.0 / bw),
        bi=jnp.zeros((num_heads, bw), f32),
        wa=jax.random.normal(ks[4], (num_heads, bw, bw), f32) * math.sqrt(1.0 / bw),
        ba=jnp.zeros((num_heads, bw), f32),
    )
    u = jax.random.uniform(ks[5], (L,), f32, minval=0.9 ** 2, maxval=0.999 ** 2)
    params["a_param"] = jnp.log(jnp.exp(-0.5 * jnp.log(u)) - 1.0)
    return params


# ----------------------------- pure-JAX reference ----------------------------
def recurrent_block_reference(x, segment_pos, params):
    B, T, W = x.shape
    L = params["wy"].shape[1]
    K = params["conv_w"].shape[0]
    H, bw, _ = params["wi"].shape

    y = _gelu_tanh(x.reshape(B * T, W) @ params["wy"] + params["by"]).reshape(B, T, L)
    xb = (x.reshape(B * T, W) @ params["wx"] + params["bx"]).reshape(B, T, L)

    notb = (segment_pos != 0).astype(jnp.float32)
    conv = jnp.zeros((B, T, L), jnp.float32)
    for k in range(K):
        xs = jnp.pad(xb, ((0, 0), (k, 0), (0, 0)))[:, :T, :]
        mask = jnp.ones((B, T), jnp.float32)
        for j in range(k):
            mask = mask * jnp.pad(notb, ((0, 0), (j, 0)), constant_values=1.0)[:, :T]
        conv = conv + xs * mask[..., None] * params["conv_w"][K - 1 - k][None, None, :]
    conv = conv + params["conv_b"][None, None, :]

    xh = conv.reshape(B, T, H, bw)
    gate_x = _sigmoid_ref(
        jnp.einsum("bthi,hij->bthj", xh, params["wi"]) + params["bi"]).reshape(B, T, L)
    gate_a = _sigmoid_ref(
        jnp.einsum("bthi,hij->bthj", xh, params["wa"]) + params["ba"]).reshape(B, T, L)

    reset = (segment_pos == 0).astype(jnp.float32)[..., None]
    log_a = -8.0 * gate_a * _softplus(params["a_param"])[None, None, :]
    a = jnp.exp(log_a)
    a_square = a * a
    gated_x = conv * gate_x
    multiplier = reset + (1.0 - reset) * jnp.sqrt(jnp.maximum(1.0 - a_square, 0.0))
    xn = gated_x * multiplier
    a_eff = a * (1.0 - reset)

    def step(h, inp):
        a_t, x_t = inp
        h = a_t * h + x_t
        return h, h

    last_h, hs = jax.lax.scan(
        step, jnp.zeros((B, L), jnp.float32),
        (jnp.swapaxes(a_eff, 0, 1), jnp.swapaxes(xn, 0, 1)))
    out = jnp.swapaxes(hs, 0, 1) * y
    return out, (last_h, xb[:, T - (K - 1):, :])


# --------------------------------- main --------------------------------------
if __name__ == "__main__":
    width = 32          # block width
    num_heads = 4       # RG-LRU heads
    lru_width = 128     # lane-dense internal width
    temporal_width = 4  # conv1d_temporal_width
    B, T = 2, 64

    key = jax.random.PRNGKey(0)
    kx, kp = jax.random.split(key)
    x = jax.random.normal(kx, (B, T, width), jnp.float32)
    # batch row 1 contains a document boundary at t=31 (last row of a time
    # chunk when t_chunk=32) to exercise the reset / conv-mask / carried-state
    # paths across a time-chunk edge; row 0 is a single document.
    sp0 = jnp.arange(T, dtype=jnp.int32)
    sp1 = jnp.concatenate([jnp.arange(31, dtype=jnp.int32),
                           jnp.arange(T - 31, dtype=jnp.int32)])
    segment_pos = jnp.stack([sp0, sp1], axis=0)
    params = init_params(kp, width, num_heads, lru_width, temporal_width)

    # t_chunk=32 < default so the demo exercises multiple time chunks; the
    # production default is min(256, T).
    out, (rg_lru_state, conv_state) = recurrent_block_forward(
        x, segment_pos, params, t_chunk=32)
    jax.block_until_ready(out)

    ref_out, (ref_h, ref_conv) = recurrent_block_reference(x, segment_pos, params)
    err = max(
        float(jnp.max(jnp.abs(out.astype(jnp.float32) - ref_out))),
        float(jnp.max(jnp.abs(rg_lru_state - ref_h))),
        float(jnp.max(jnp.abs(conv_state - ref_conv))),
    )
    assert err < 5e-2, f"mismatch vs reference: {err}"
    print("KERNEL_OK")
</pallas_src>

<mosaic_0001>
module attributes {stable_mosaic.version = 11 : i64} {
  func.func @_recurrent_block_kernel(%arg0: i32, %arg1: i32, %arg2: memref<1x32x32xbf16, #tpu.memory_space<vmem>>, %arg3: memref<32x256xbf16, #tpu.memory_space<vmem>>, %arg4: memref<1x256xf32, #tpu.memory_space<vmem>>, %arg5: memref<4x128xf32, #tpu.memory_space<vmem>>, %arg6: memref<1x128xf32, #tpu.memory_space<vmem>>, %arg7: memref<4x32x64xbf16, #tpu.memory_space<vmem>>, %arg8: memref<1x256xf32, #tpu.memory_space<vmem>>, %arg9: memref<1x128xf32, #tpu.memory_space<vmem>>, %arg10: memref<1x32x1xf32, #tpu.memory_space<vmem>>, %arg11: memref<1x32x128xbf16, #tpu.memory_space<vmem>>, %arg12: memref<1x3x128xf32, #tpu.memory_space<vmem>>, %arg13: memref<1x1x128xf32, #tpu.memory_space<vmem>>, %arg14: memref<40x128xf32, #tpu.memory_space<vmem>>, %arg15: memref<40x1xf32, #tpu.memory_space<vmem>>, %arg16: memref<1x128xf32, #tpu.memory_space<vmem>>, %arg17: memref<32x256xf32, #tpu.memory_space<vmem>>) attributes {dimension_semantics = [#tpu.dimension_semantics<parallel>, #tpu.dimension_semantics<arbitrary>], iteration_bounds = array<i64: 2, 2>, scalar_prefetch = 0 : i64, scratch_operands = 4 : i64, tpu.core_type = #tpu.core_type<tc>, window_params = [{transform_indices = @transform_0, window_bounds = array<i64: 1, 32, 32>}, {pipeline_mode = #tpu.pipeline_mode<synchronous>, transform_indices = @transform_1, window_bounds = array<i64: 32, 256>}, {pipeline_mode = #tpu.pipeline_mode<synchronous>, transform_indices = @transform_2, window_bounds = array<i64: 1, 256>}, {pipeline_mode = #tpu.pipeline_mode<synchronous>, transform_indices = @transform_3, window_bounds = array<i64: 4, 128>}, {pipeline_mode = #tpu.pipeline_mode<synchronous>, transform_indices = @transform_4, window_bounds = array<i64: 1, 128>}, {pipeline_mode = #tpu.pipeline_mode<synchronous>, transform_indices = @transform_5, window_bounds = array<i64: 4, 32, 64>}, {pipeline_mode = #tpu.pipeline_mode<synchronous>, transform_indices = @transform_6, window_bounds = array<i64: 1, 256>}, {pipeline_mode = #tpu.pipeline_mode<synchronous>, transform_indices = @transform_7, window_bounds = array<i64: 1, 128>}, {transform_indices = @transform_8, window_bounds = array<i64: 1, 32, 1>}, {transform_indices = @transform_9, window_bounds = array<i64: 1, 32, 128>}, {transform_indices = @transform_10, window_bounds = array<i64: 1, 3, 128>}, {transform_indices = @transform_11, window_bounds = array<i64: 1, 1, 128>}]} {
    %c0_i32 = arith.constant 0 : i32
    %0 = arith.cmpi eq, %arg1, %c0_i32 : i32
    %1 = arith.extui %0 : i1 to i32
    %c0_i32_0 = arith.constant 0 : i32
    %2 = arith.cmpi ne, %1, %c0_i32_0 : i32
    scf.if %2 {
      %cst_92 = arith.constant 0.000000e+00 : f32
      %192 = vector.broadcast %cst_92 : f32 to vector<8x128xf32>
      %c0_93 = arith.constant 0 : index
      %c0_94 = arith.constant 0 : index
      %193 = vector.load %arg14[%c0_93, %c0_94] : memref<40x128xf32, #tpu.memory_space<vmem>>, vector<8x128xf32>
      tpu.vector_store %arg14[%c0_93, %c0_94], %192 {strides = array<i32>} : memref<40x128xf32, #tpu.memory_space<vmem>>, vector<8x128xf32>,
      %cst_95 = arith.constant 1.000000e+00 : f32
      %194 = vector.broadcast %cst_95 : f32 to vector<8x1xf32>
      %c0_96 = arith.constant 0 : index
      %c0_97 = arith.constant 0 : index
      %195 = vector.load %arg15[%c0_96, %c0_97] : memref<40x1xf32, #tpu.memory_space<vmem>>, vector<8x1xf32>
      tpu.vector_store %arg15[%c0_96, %c0_97], %194 {strides = array<i32>} : memref<40x1xf32, #tpu.memory_space<vmem>>, vector<8x1xf32>,
      %cst_98 = arith.constant 0.000000e+00 : f32
      %196 = vector.broadcast %cst_98 : f32 to vector<1x128xf32>
      %c0_99 = arith.constant 0 : index
      %c0_100 = arith.constant 0 : index
      %197 = vector.load %arg16[%c0_99, %c0_100] : memref<1x128xf32, #tpu.memory_space<vmem>>, vector<1x128xf32>
      tpu.vector_store %arg16[%c0_99, %c0_100], %196 {strides = array<i32>} : memref<1x128xf32, #tpu.memory_space<vmem>>, vector<1x128xf32>,
    } else {
    }
    %c0 = arith.constant 0 : index
    %c0_1 = arith.constant 0 : index
    %c0_2 = arith.constant 0 : index
    %3 = vector.load %arg2[%c0, %c0_1, %c0_2] : memref<1x32x32xbf16, #tpu.memory_space<vmem>>, vector<1x32x32xbf16>
    %4 = vector.shape_cast %3 : vector<1x32x32xbf16> to vector<32x32xbf16>
    %c0_3 = arith.constant 0 : index
    %c0_4 = arith.constant 0 : index
    %c0_5 = arith.constant 0 : index
    %5 = vector.load %arg10[%c0_3, %c0_4, %c0_5] : memref<1x32x1xf32, #tpu.memory_space<vmem>>, vector<1x32x1xf32>
    %6 = vector.shape_cast %5 : vector<1x32x1xf32> to vector<32x1xf32>
    %7 = vector.shape_cast %6 : vector<32x1xf32> to vector<32x1xf32>
    %8 = vector.broadcast %7 : vector<32x1xf32> to vector<32x128xf32>
    %c0_6 = arith.constant 0 : index
    %c0_7 = arith.constant 0 : index
    %9 = vector.load %arg3[%c0_6, %c0_7] : memref<32x256xbf16, #tpu.memory_space<vmem>>, vector<32x256xbf16>
    %cst = arith.constant dense<0.000000e+00> : vector<32x256xf32>
    %10 = tpu.matmul %4, %9, %cst {dimension_numbers = #tpu.dot_dimension_numbers<[1], [0], [0], [1], [0, 0, 1, 1], [], []>} : vector<32x32xbf16>, vector<32x256xbf16>, vector<32x256xf32> -> vector<32x256xf32>
    %c0_8 = arith.constant 0 : index
    %c0_9 = arith.constant 0 : index
    %11 = vector.load %arg4[%c0_8, %c0_9] : memref<1x256xf32, #tpu.memory_space<vmem>>, vector<1x256xf32>
    %12 = vector.broadcast %11 : vector<1x256xf32> to vector<32x256xf32>
    %13 = arith.addf %10, %12 : vector<32x256xf32>
    %14 = vector.extract_strided_slice %13 {offsets = [0, 0], sizes = [32, 128], strides = [1, 1]} : vector<32x256xf32> to vector<32x128xf32>
    %cst_10 = arith.constant 5.000000e-01 : f32
    %15 = vector.broadcast %cst_10 : f32 to vector<32x128xf32>
    %16 = arith.mulf %15, %14 : vector<32x128xf32>
    %cst_11 = arith.constant 4.471500e-02 : f32
    %17 = vector.broadcast %cst_11 : f32 to vector<32x128xf32>
    %18 = arith.mulf %17, %14 : vector<32x128xf32>
    %19 = arith.mulf %18, %14 : vector<32x128xf32>
    %20 = arith.mulf %19, %14 : vector<32x128xf32>
    %21 = arith.addf %14, %20 : vector<32x128xf32>
    %cst_12 = arith.constant 0.797884583 : f32
    %22 = vector.broadcast %cst_12 : f32 to vector<32x128xf32>
    %23 = arith.mulf %22, %21 : vector<32x128xf32>
    %24 = math.tanh %23 : vector<32x128xf32>
    %cst_13 = arith.constant 1.000000e+00 : f32
    %25 = vector.broadcast %cst_13 : f32 to vector<32x128xf32>
    %26 = arith.addf %25, %24 : vector<32x128xf32>
    %27 = arith.mulf %16, %26 : vector<32x128xf32>
    %28 = vector.extract_strided_slice %13 {offsets = [0, 128], sizes = [32, 128], strides = [1, 1]} : vector<32x256xf32> to vector<32x128xf32>
    %c8 = arith.constant 8 : index
    %c0_14 = arith.constant 0 : index
    %29 = vector.load %arg14[%c8, %c0_14] : memref<40x128xf32, #tpu.memory_space<vmem>>, vector<32x128xf32>
    tpu.vector_store %arg14[%c8, %c0_14], %28 {strides = array<i32>} : memref<40x128xf32, #tpu.memory_space<vmem>>, vector<32x128xf32>,
    %c8_15 = arith.constant 8 : index
    %c0_16 = arith.constant 0 : index
    %30 = vector.load %arg15[%c8_15, %c0_16] : memref<40x1xf32, #tpu.memory_space<vmem>>, vector<32x1xf32>
    tpu.vector_store %arg15[%c8_15, %c0_16], %6 {strides = array<i32>} : memref<40x1xf32, #tpu.memory_space<vmem>>, vector<32x1xf32>,
    %c3 = arith.constant 3 : index
    %c0_17 = arith.constant 0 : index
    %31 = vector.load %arg5[%c3, %c0_17] : memref<4x128xf32, #tpu.memory_space<vmem>>, vector<1x128xf32>
    %32 = vector.broadcast %31 : vector<1x128xf32> to vector<32x128xf32>
    %33 = arith.mulf %28, %32 : vector<32x128xf32>
    %c7 = arith.constant 7 : index
    %c0_18 = arith.constant 0 : index
    %34 = vector.load %arg14[%c7, %c0_18] : memref<40x128xf32, #tpu.memory_space<vmem>>, vector<32x128xf32>
    %35 = arith.mulf %34, %8 : vector<32x128xf32>
    %c2 = arith.constant 2 : index
    %c0_19 = arith.constant 0 : index
    %36 = vector.load %arg5[%c2, %c0_19] : memref<4x128xf32, #tpu.memory_space<vmem>>, vector<1x128xf32>
    %37 = vector.broadcast %36 : vector<1x128xf32> to vector<32x128xf32>
    %38 = arith.mulf %35, %37 : vector<32x128xf32>
    %39 = arith.addf %33, %38 : vector<32x128xf32>
    %c7_20 = arith.constant 7 : index
    %c0_21 = arith.constant 0 : index
    %40 = vector.load %arg15[%c7_20, %c0_21] : memref<40x1xf32, #tpu.memory_space<vmem>>, vector<32x1xf32>
    %41 = vector.broadcast %40 : vector<32x1xf32> to vector<32x128xf32>
    %42 = arith.mulf %8, %41 : vector<32x128xf32>
    %c6 = arith.constant 6 : index
    %c0_22 = arith.constant 0 : index
    %43 = vector.load %arg14[%c6, %c0_22] : memref<40x128xf32, #tpu.memory_space<vmem>>, vector<32x128xf32>
    %44 = arith.mulf %43, %42 : vector<32x128xf32>
    %c1 = arith.constant 1 : index
    %c0_23 = arith.constant 0 : index
    %45 = vector.load %arg5[%c1, %c0_23] : memref<4x128xf32, #tpu.memory_space<vmem>>, vector<1x128xf32>
    %46 = vector.broadcast %45 : vector<1x128xf32> to vector<32x128xf32>
    %47 = arith.mulf %44, %46 : vector<32x128xf32>
    %48 = arith.addf %39, %47 : vector<32x128xf32>
    %c6_24 = arith.constant 6 : index
    %c0_25 = arith.constant 0 : index
    %49 = vector.load %arg15[%c6_24, %c0_25] : memref<40x1xf32, #tpu.memory_space<vmem>>, vector<32x1xf32>
    %50 = vector.broadcast %49 : vector<32x1xf32> to vector<32x128xf32>
    %51 = arith.mulf %42, %50 : vector<32x128xf32>
    %c5 = arith.constant 5 : index
    %c0_26 = arith.constant 0 : index
    %52 = vector.load %arg14[%c5, %c0_26] : memref<40x128xf32, #tpu.memory_space<vmem>>, vector<32x128xf32>
    %53 = arith.mulf %52, %51 : vector<32x128xf32>
    %c0_27 = arith.constant 0 : index
    %c0_28 = arith.constant 0 : index
    %54 = vector.load %arg5[%c0_27, %c0_28] : memref<4x128xf32, #tpu.memory_space<vmem>>, vector<1x128xf32>
    %55 = vector.broadcast %54 : vector<1x128xf32> to vector<32x128xf32>
    %56 = arith.mulf %53, %55 : vector<32x128xf32>
    %57 = arith.addf %48, %56 : vector<32x128xf32>
    %c0_29 = arith.constant 0 : index
    %c0_30 = arith.constant 0 : index
    %58 = vector.load %arg6[%c0_29, %c0_30] : memref<1x128xf32, #tpu.memory_space<vmem>>, vector<1x128xf32>
    %59 = vector.broadcast %58 : vector<1x128xf32> to vector<32x128xf32>
    %60 = arith.addf %57, %59 : vector<32x128xf32>
    %61 = vector.extract_strided_slice %28 {offsets = [24, 0], sizes = [8, 128], strides = [1, 1]} : vector<32x128xf32> to vector<8x128xf32>
    %c0_31 = arith.constant 0 : index
    %c0_32 = arith.constant 0 : index
    %62 = vector.load %arg14[%c0_31, %c0_32] : memref<40x128xf32, #tpu.memory_space<vmem>>, vector<8x128xf32>
    tpu.vector_store %arg14[%c0_31, %c0_32], %61 {strides = array<i32>} : memref<40x128xf32, #tpu.memory_space<vmem>>, vector<8x128xf32>,
    %63 = vector.extract_strided_slice %6 {offsets = [24, 0], sizes = [8, 1], strides = [1, 1]} : vector<32x1xf32> to vector<8x1xf32>
    %c0_33 = arith.constant 0 : index
    %c0_34 = arith.constant 0 : index
    %64 = vector.load %arg15[%c0_33, %c0_34] : memref<40x1xf32, #tpu.memory_space<vmem>>, vector<8x1xf32>
    tpu.vector_store %arg15[%c0_33, %c0_34], %63 {strides = array<i32>} : memref<40x1xf32, #tpu.memory_space<vmem>>, vector<8x1xf32>,
    %65 = arith.truncf %60 : vector<32x128xf32> to vector<32x128xbf16>
    %66 = vector.extract_strided_slice %65 {offsets = [0, 0], sizes = [32, 32], strides = [1, 1]} : vector<32x128xbf16> to vector<32x32xbf16>
    %c0_35 = arith.constant 0 : index
    %c0_36 = arith.constant 0 : index
    %c0_37 = arith.constant 0 : index
    %67 = vector.load %arg7[%c0_35, %c0_36, %c0_37] : memref<4x32x64xbf16, #tpu.memory_space<vmem>>, vector<1x32x64xbf16>
    %68 = vector.shape_cast %67 : vector<1x32x64xbf16> to vector<32x64xbf16>
    %cst_38 = arith.constant dense<0.000000e+00> : vector<32x64xf32>
    %69 = tpu.matmul %66, %68, %cst_38 {dimension_numbers = #tpu.dot_dimension_numbers<[1], [0], [0], [1], [0, 0, 1, 1], [], []>} : vector<32x32xbf16>, vector<32x64xbf16>, vector<32x64xf32> -> vector<32x64xf32>
    %70 = vector.extract_strided_slice %69 {offsets = [0, 0], sizes = [32, 32], strides = [1, 1]} : vector<32x64xf32> to vector<32x32xf32>
    %c0_39 = arith.constant 0 : index
    %c0_40 = arith.constant 0 : index
    %71 = vector.load %arg17[%c0_39, %c0_40] : memref<32x256xf32, #tpu.memory_space<vmem>>, vector<32x32xf32>
    tpu.vector_store %arg17[%c0_39, %c0_40], %70 {strides = array<i32>} : memref<32x256xf32, #tpu.memory_space<vmem>>, vector<32x32xf32>,
    %72 = vector.extract_strided_slice %69 {offsets = [0, 32], sizes = [32, 32], strides = [1, 1]} : vector<32x64xf32> to vector<32x32xf32>
    %c0_41 = arith.constant 0 : index
    %c128 = arith.constant 128 : index
    %73 = vector.load %arg17[%c0_41, %c128] : memref<32x256xf32, #tpu.memory_space<vmem>>, vector<32x32xf32>
    tpu.vector_store %arg17[%c0_41, %c128], %72 {strides = array<i32>} : memref<32x256xf32, #tpu.memory_space<vmem>>, vector<32x32xf32>,
    %74 = vector.extract_strided_slice %65 {offsets = [0, 32], sizes = [32, 32], strides = [1, 1]} : vector<32x128xbf16> to vector<32x32xbf16>
    %c1_42 = arith.constant 1 : index
    %c0_43 = arith.constant 0 : index
    %c0_44 = arith.constant 0 : index
    %75 = vector.load %arg7[%c1_42, %c0_43, %c0_44] : memref<4x32x64xbf16, #tpu.memory_space<vmem>>, vector<1x32x64xbf16>
    %76 = vector.shape_cast %75 : vector<1x32x64xbf16> to vector<32x64xbf16>
    %cst_45 = arith.constant dense<0.000000e+00> : vector<32x64xf32>
    %77 = tpu.matmul %74, %76, %cst_45 {dimension_numbers = #tpu.dot_dimension_numbers<[1], [0], [0], [1], [0, 0, 1, 1], [], []>} : vector<32x32xbf16>, vector<32x64xbf16>, vector<32x64xf32> -> vector<32x64xf32>
    %78 = vector.extract_strided_slice %77 {offsets = [0, 0], sizes = [32, 32], strides = [1, 1]} : vector<32x64xf32> to vector<32x32xf32>
    %c0_46 = arith.constant 0 : index
    %c32 = arith.constant 32 : index
    %79 = vector.load %arg17[%c0_46, %c32] : memref<32x256xf32, #tpu.memory_space<vmem>>, vector<32x32xf32>
    tpu.vector_store %arg17[%c0_46, %c32], %78 {strides = array<i32>} : memref<32x256xf32, #tpu.memory_space<vmem>>, vector<32x32xf32>,
    %80 = vector.extract_strided_slice %77 {offsets = [0, 32], sizes = [32, 32], strides = [1, 1]} : vector<32x64xf32> to vector<32x32xf32>
    %c0_47 = arith.constant 0 : index
    %c160 = arith.constant 160 : index
    %81 = vector.load %arg17[%c0_47, %c160] : memref<32x256xf32, #tpu.memory_space<vmem>>, vector<32x32xf32>
    tpu.vector_store %arg17[%c0_47, %c160], %80 {strides = array<i32>} : memref<32x256xf32, #tpu.memory_space<vmem>>, vector<32x32xf32>,
    %82 = vector.extract_strided_slice %65 {offsets = [0, 64], sizes = [32, 32], strides = [1, 1]} : vector<32x128xbf16> to vector<32x32xbf16>
    %c2_48 = arith.constant 2 : index
    %c0_49 = arith.constant 0 : index
    %c0_50 = arith.constant 0 : index
    %83 = vector.load %arg7[%c2_48, %c0_49, %c0_50] : memref<4x32x64xbf16, #tpu.memory_space<vmem>>, vector<1x32x64xbf16>
    %84 = vector.shape_cast %83 : vector<1x32x64xbf16> to vector<32x64xbf16>
    %cst_51 = arith.constant dense<0.000000e+00> : vector<32x64xf32>
    %85 = tpu.matmul %82, %84, %cst_51 {dimension_numbers = #tpu.dot_dimension_numbers<[1], [0], [0], [1], [0, 0, 1, 1], [], []>} : vector<32x32xbf16>, vector<32x64xbf16>, vector<32x64xf32> -> vector<32x64xf32>
    %86 = vector.extract_strided_slice %85 {offsets = [0, 0], sizes = [32, 32], strides = [1, 1]} : vector<32x64xf32> to vector<32x32xf32>
    %c0_52 = arith.constant 0 : index
    %c64 = arith.constant 64 : index
    %87 = vector.load %arg17[%c0_52, %c64] : memref<32x256xf32, #tpu.memory_space<vmem>>, vector<32x32xf32>
    tpu.vector_store %arg17[%c0_52, %c64], %86 {strides = array<i32>} : memref<32x256xf32, #tpu.memory_space<vmem>>, vector<32x32xf32>,
    %88 = vector.extract_strided_slice %85 {offsets = [0, 32], sizes = [32, 32], strides = [1, 1]} : vector<32x64xf32> to vector<32x32xf32>
    %c0_53 = arith.constant 0 : index
    %c192 = arith.constant 192 : index
    %89 = vector.load %arg17[%c0_53, %c192] : memref<32x256xf32, #tpu.memory_space<vmem>>, vector<32x32xf32>
    tpu.vector_store %arg17[%c0_53, %c192], %88 {strides = array<i32>} : memref<32x256xf32, #tpu.memory_space<vmem>>, vector<32x32xf32>,
    %90 = vector.extract_strided_slice %65 {offsets = [0, 96], sizes = [32, 32], strides = [1, 1]} : vector<32x128xbf16> to vector<32x32xbf16>
    %c3_54 = arith.constant 3 : index
    %c0_55 = arith.constant 0 : index
    %c0_56 = arith.constant 0 : index
    %91 = vector.load %arg7[%c3_54, %c0_55, %c0_56] : memref<4x32x64xbf16, #tpu.memory_space<vmem>>, vector<1x32x64xbf16>
    %92 = vector.shape_cast %91 : vector<1x32x64xbf16> to vector<32x64xbf16>
    %cst_57 = arith.constant dense<0.000000e+00> : vector<32x64xf32>
    %93 = tpu.matmul %90, %92, %cst_57 {dimension_numbers = #tpu.dot_dimension_numbers<[1], [0], [0], [1], [0, 0, 1, 1], [], []>} : vector<32x32xbf16>, vector<32x64xbf16>, vector<32x64xf32> -> vector<32x64xf32>
    %94 = vector.extract_strided_slice %93 {offsets = [0, 0], sizes = [32, 32], strides = [1, 1]} : vector<32x64xf32> to vector<32x32xf32>
    %c0_58 = arith.constant 0 : index
    %c96 = arith.constant 96 : index
    %95 = vector.load %arg17[%c0_58, %c96] : memref<32x256xf32, #tpu.memory_space<vmem>>, vector<32x32xf32>
    tpu.vector_store %arg17[%c0_58, %c96], %94 {strides = array<i32>} : memref<32x256xf32, #tpu.memory_space<vmem>>, vector<32x32xf32>,
    %96 = vector.extract_strided_slice %93 {offsets = [0, 32], sizes = [32, 32], strides = [1, 1]} : vector<32x64xf32> to vector<32x32xf32>
    %c0_59 = arith.constant 0 : index
    %c224 = arith.constant 224 : index
    %97 = vector.load %arg17[%c0_59, %c224] : memref<32x256xf32, #tpu.memory_space<vmem>>, vector<32x32xf32>
    tpu.vector_store %arg17[%c0_59, %c224], %96 {strides = array<i32>} : memref<32x256xf32, #tpu.memory_space<vmem>>, vector<32x32xf32>,
    %c0_60 = arith.constant 0 : index
    %c0_61 = arith.constant 0 : index
    %98 = vector.load %arg17[%c0_60, %c0_61] : memref<32x256xf32, #tpu.memory_space<vmem>>, vector<32x256xf32>
    %c0_62 = arith.constant 0 : index
    %c0_63 = arith.constant 0 : index
    %99 = vector.load %arg8[%c0_62, %c0_63] : memref<1x256xf32, #tpu.memory_space<vmem>>, vector<1x256xf32>
    %100 = vector.broadcast %99 : vector<1x256xf32> to vector<32x256xf32>
    %101 = arith.addf %98, %100 : vector<32x256xf32>
    %102 = vector.extract_strided_slice %101 {offsets = [0, 0], sizes = [32, 128], strides = [1, 1]} : vector<32x256xf32> to vector<32x128xf32>
    %cst_64 = arith.constant 0.000000e+00 : f32
    %103 = vector.broadcast %cst_64 : f32 to vector<32x128xf32>
    %104 = arith.subf %103, %102 : vector<32x128xf32>
    %105 = math.exp %104 : vector<32x128xf32>
    %cst_65 = arith.constant 1.000000e+00 : f32
    %106 = vector.broadcast %cst_65 : f32 to vector<32x128xf32>
    %107 = arith.addf %106, %105 : vector<32x128xf32>
    %108 = tpu.reciprocal %107 {approx = true} : vector<32x128xf32> -> vector<32x128xf32>
    %109 = vector.extract_strided_slice %101 {offsets = [0, 128], sizes = [32, 128], strides = [1, 1]} : vector<32x256xf32> to vector<32x128xf32>
    %cst_66 = arith.constant 0.000000e+00 : f32
    %110 = vector.broadcast %cst_66 : f32 to vector<32x128xf32>
    %111 = arith.subf %110, %109 : vector<32x128xf32>
    %112 = math.exp %111 : vector<32x128xf32>
    %cst_67 = arith.constant 1.000000e+00 : f32
    %113 = vector.broadcast %cst_67 : f32 to vector<32x128xf32>
    %114 = arith.addf %113, %112 : vector<32x128xf32>
    %cst_68 = arith.constant 1.000000e+00 : f32
    %115 = vector.broadcast %cst_68 : f32 to vector<32x128xf32>
    %116 = arith.divf %115, %114 : vector<32x128xf32>
    %c0_69 = arith.constant 0 : index
    %c0_70 = arith.constant 0 : index
    %117 = vector.load %arg9[%c0_69, %c0_70] : memref<1x128xf32, #tpu.memory_space<vmem>>, vector<1x128xf32>
    %118 = vector.broadcast %117 : vector<1x128xf32> to vector<32x128xf32>
    %119 = arith.mulf %116, %118 : vector<32x128xf32>
    %120 = math.exp %119 : vector<32x128xf32>
    %121 = arith.mulf %120, %120 : vector<32x128xf32>
    %cst_71 = arith.constant 1.000000e+00 : f32
    %122 = vector.broadcast %cst_71 : f32 to vector<32x128xf32>
    %123 = arith.subf %122, %121 : vector<32x128xf32>
    %cst_72 = arith.constant 0.000000e+00 : f32
    %124 = vector.broadcast %cst_72 : f32 to vector<32x128xf32>
    %125 = arith.maximumf %123, %124 : vector<32x128xf32>
    %126 = math.sqrt %125 : vector<32x128xf32>
    %cst_73 = arith.constant 1.000000e+00 : f32
    %127 = vector.broadcast %cst_73 : f32 to vector<32x128xf32>
    %128 = arith.subf %127, %8 : vector<32x128xf32>
    %129 = arith.mulf %8, %126 : vector<32x128xf32>
    %130 = arith.addf %128, %129 : vector<32x128xf32>
    %131 = arith.mulf %60, %108 : vector<32x128xf32>
    %132 = arith.mulf %131, %130 : vector<32x128xf32>
    %133 = arith.mulf %120, %8 : vector<32x128xf32>
    %cst_74 = arith.constant 1.000000e+00 : f32
    %134 = vector.broadcast %cst_74 : f32 to vector<1x128xf32>
    %135 = vector.extract_strided_slice %133 {offsets = [0, 0], sizes = [31, 128], strides = [1, 1]} : vector<32x128xf32> to vector<31x128xf32>
    %136 = tpu.concatenate %134, %135 in 0 : vector<1x128xf32>, vector<31x128xf32> -> vector<32x128xf32>
    %cst_75 = arith.constant 0.000000e+00 : f32
    %137 = vector.broadcast %cst_75 : f32 to vector<1x128xf32>
    %138 = vector.extract_strided_slice %132 {offsets = [0, 0], sizes = [31, 128], strides = [1, 1]} : vector<32x128xf32> to vector<31x128xf32>
    %139 = tpu.concatenate %137, %138 in 0 : vector<1x128xf32>, vector<31x128xf32> -> vector<32x128xf32>
    %140 = arith.mulf %133, %139 : vector<32x128xf32>
    %141 = arith.addf %140, %132 : vector<32x128xf32>
    %142 = arith.mulf %133, %136 : vector<32x128xf32>
    %cst_76 = arith.constant 1.000000e+00 : f32
    %143 = vector.broadcast %cst_76 : f32 to vector<2x128xf32>
    %144 = vector.extract_strided_slice %142 {offsets = [0, 0], sizes = [30, 128], strides = [1, 1]} : vector<32x128xf32> to vector<30x128xf32>
    %145 = tpu.concatenate %143, %144 in 0 : vector<2x128xf32>, vector<30x128xf32> -> vector<32x128xf32>
    %cst_77 = arith.constant 0.000000e+00 : f32
    %146 = vector.broadcast %cst_77 : f32 to vector<2x128xf32>
    %147 = vector.extract_strided_slice %141 {offsets = [0, 0], sizes = [30, 128], strides = [1, 1]} : vector<32x128xf32> to vector<30x128xf32>
    %148 = tpu.concatenate %146, %147 in 0 : vector<2x128xf32>, vector<30x128xf32> -> vector<32x128xf32>
    %149 = arith.mulf %142, %148 : vector<32x128xf32>
    %150 = arith.addf %149, %141 : vector<32x128xf32>
    %151 = arith.mulf %142, %145 : vector<32x128xf32>
    %cst_78 = arith.constant 1.000000e+00 : f32
    %152 = vector.broadcast %cst_78 : f32 to vector<4x128xf32>
    %153 = vector.extract_strided_slice %151 {offsets = [0, 0], sizes = [28, 128], strides = [1, 1]} : vector<32x128xf32> to vector<28x128xf32>
    %154 = tpu.concatenate %152, %153 in 0 : vector<4x128xf32>, vector<28x128xf32> -> vector<32x128xf32>
    %cst_79 = arith.constant 0.000000e+00 : f32
    %155 = vector.broadcast %cst_79 : f32 to vector<4x128xf32>
    %156 = vector.extract_strided_slice %150 {offsets = [0, 0], sizes = [28, 128], strides = [1, 1]} : vector<32x128xf32> to vector<28x128xf32>
    %157 = tpu.concatenate %155, %156 in 0 : vector<4x128xf32>, vector<28x128xf32> -> vector<32x128xf32>
    %158 = arith.mulf %151, %157 : vector<32x128xf32>
    %159 = arith.addf %158, %150 : vector<32x128xf32>
    %160 = arith.mulf %151, %154 : vector<32x128xf32>
    %cst_80 = arith.constant 1.000000e+00 : f32
    %161 = vector.broadcast %cst_80 : f32 to vector<8x128xf32>
    %162 = vector.extract_strided_slice %160 {offsets = [0, 0], sizes = [24, 128], strides = [1, 1]} : vector<32x128xf32> to vector<24x128xf32>
    %163 = tpu.concatenate %161, %162 in 0 : vector<8x128xf32>, vector<24x128xf32> -> vector<32x128xf32>
    %cst_81 = arith.constant 0.000000e+00 : f32
    %164 = vector.broadcast %cst_81 : f32 to vector<8x128xf32>
    %165 = vector.extract_strided_slice %159 {offsets = [0, 0], sizes = [24, 128], strides = [1, 1]} : vector<32x128xf32> to vector<24x128xf32>
    %166 = tpu.concatenate %164, %165 in 0 : vector<8x128xf32>, vector<24x128xf32> -> vector<32x128xf32>
    %167 = arith.mulf %160, %166 : vector<32x128xf32>
    %168 = arith.addf %167, %159 : vector<32x128xf32>
    %169 = arith.mulf %160, %163 : vector<32x128xf32>
    %cst_82 = arith.constant 1.000000e+00 : f32
    %170 = vector.broadcast %cst_82 : f32 to vector<16x128xf32>
    %171 = vector.extract_strided_slice %169 {offsets = [0, 0], sizes = [16, 128], strides = [1, 1]} : vector<32x128xf32> to vector<16x128xf32>
    %172 = tpu.concatenate %170, %171 in 0 : vector<16x128xf32>, vector<16x128xf32> -> vector<32x128xf32>
    %cst_83 = arith.constant 0.000000e+00 : f32
    %173 = vector.broadcast %cst_83 : f32 to vector<16x128xf32>
    %174 = vector.extract_strided_slice %168 {offsets = [0, 0], sizes = [16, 128], strides = [1, 1]} : vector<32x128xf32> to vector<16x128xf32>
    %175 = tpu.concatenate %173, %174 in 0 : vector<16x128xf32>, vector<16x128xf32> -> vector<32x128xf32>
    %176 = arith.mulf %169, %175 : vector<32x128xf32>
    %177 = arith.addf %176, %168 : vector<32x128xf32>
    %178 = arith.mulf %169, %172 : vector<32x128xf32>
    %c0_84 = arith.constant 0 : index
    %c0_85 = arith.constant 0 : index
    %179 = vector.load %arg16[%c0_84, %c0_85] : memref<1x128xf32, #tpu.memory_space<vmem>>, vector<1x128xf32>
    %180 = vector.broadcast %179 : vector<1x128xf32> to vector<32x128xf32>
    %181 = arith.mulf %178, %180 : vector<32x128xf32>
    %182 = arith.addf %177, %181 : vector<32x128xf32>
    %183 = vector.extract_strided_slice %182 {offsets = [31, 0], sizes = [1, 128], strides = [1, 1]} : vector<32x128xf32> to vector<1x128xf32>
    %c0_86 = arith.constant 0 : index
    %c0_87 = arith.constant 0 : index
    %184 = vector.load %arg16[%c0_86, %c0_87] : memref<1x128xf32, #tpu.memory_space<vmem>>, vector<1x128xf32>
    tpu.vector_store %arg16[%c0_86, %c0_87], %183 {strides = array<i32>} : memref<1x128xf32, #tpu.memory_space<vmem>>, vector<1x128xf32>,
    %185 = arith.mulf %182, %27 : vector<32x128xf32>
    %186 = vector.shape_cast %185 : vector<32x128xf32> to vector<1x32x128xf32>
    %187 = arith.truncf %186 : vector<1x32x128xf32> to vector<1x32x128xbf16>
    %c0_88 = arith.constant 0 : index
    %c0_89 = arith.constant 0 : index
    %c0_90 = arith.constant 0 : index
    %188 = vector.load %arg11[%c0_88, %c0_89, %c0_90] : memref<1x32x128xbf16, #tpu.memory_space<vmem>>, vector<1x32x128xbf16>
    tpu.vector_store %arg11[%c0_88, %c0_89, %c0_90], %187 {strides = array<i32>} : memref<1x32x128xbf16, #tpu.memory_space<vmem>>, vector<1x32x128xbf16>,
    %c1_i32 = arith.constant 1 : i32
    %189 = arith.cmpi eq, %arg1, %c1_i32 : i32
    %190 = arith.extui %189 : i1 to i32
    %c0_i32_91 = arith.constant 0 : i32
    %191 = arith.cmpi ne, %190, %c0_i32_91 : i32
    scf.if %191 {
      %192 = vector.extract_strided_slice %28 {offsets = [29, 0], sizes = [3, 128], strides = [1, 1]} : vector<32x128xf32> to vector<3x128xf32>
      %193 = vector.shape_cast %192 : vector<3x128xf32> to vector<1x3x128xf32>
      %c0_92 = arith.constant 0 : index
      %c0_93 = arith.constant 0 : index
      %c0_94 = arith.constant 0 : index
      %194 = vector.load %arg12[%c0_92, %c0_93, %c0_94] : memref<1x3x128xf32, #tpu.memory_space<vmem>>, vector<1x3x128xf32>
      tpu.vector_store %arg12[%c0_92, %c0_93, %c0_94], %193 {strides = array<i32>} : memref<1x3x128xf32, #tpu.memory_space<vmem>>, vector<1x3x128xf32>,
      %195 = vector.shape_cast %183 : vector<1x128xf32> to vector<1x1x128xf32>
      %c0_95 = arith.constant 0 : index
      %c0_96 = arith.constant 0 : index
      %c0_97 = arith.constant 0 : index
      %196 = vector.load %arg13[%c0_95, %c0_96, %c0_97] : memref<1x1x128xf32, #tpu.memory_space<vmem>>, vector<1x1x128xf32>
      tpu.vector_store %arg13[%c0_95, %c0_96, %c0_97], %195 {strides = array<i32>} : memref<1x1x128xf32, #tpu.memory_space<vmem>>, vector<1x1x128xf32>,
    } else {
    }
    return
  }
  func.func @transform_0(%arg0: i32, %arg1: i32) -> (i32, i32, i32) {
    %c0_i32 = arith.constant 0 : i32
    %c0_i32_0 = arith.constant 0 : i32
    return %arg0, %arg1, %c0_i32 : i32, i32, i32
  }
  func.func @transform_1(%arg0: i32, %arg1: i32) -> (i32, i32) {
    %c0_i32 = arith.constant 0 : i32
    %c0_i32_0 = arith.constant 0 : i32
    %c0_i32_1 = arith.constant 0 : i32
    return %c0_i32, %c0_i32_0 : i32, i32
  }
  func.func @transform_2(%arg0: i32, %arg1: i32) -> (i32, i32) {
    %c0_i32 = arith.constant 0 : i32
    %c0_i32_0 = arith.constant 0 : i32
    %c0_i32_1 = arith.constant 0 : i32
    return %c0_i32, %c0_i32_0 : i32, i32
  }
  func.func @transform_3(%arg0: i32, %arg1: i32) -> (i32, i32) {
    %c0_i32 = arith.constant 0 : i32
    %c0_i32_0 = arith.constant 0 : i32
    %c0_i32_1 = arith.constant 0 : i32
    return %c0_i32, %c0_i32_0 : i32, i32
  }
  func.func @transform_4(%arg0: i32, %arg1: i32) -> (i32, i32) {
    %c0_i32 = arith.constant 0 : i32
    %c0_i32_0 = arith.constant 0 : i32
    %c0_i32_1 = arith.constant 0 : i32
    return %c0_i32, %c0_i32_0 : i32, i32
  }
  func.func @transform_5(%arg0: i32, %arg1: i32) -> (i32, i32, i32) {
    %c0_i32 = arith.constant 0 : i32
    %c0_i32_0 = arith.constant 0 : i32
    %c0_i32_1 = arith.constant 0 : i32
    %c0_i32_2 = arith.constant 0 : i32
    return %c0_i32, %c0_i32_0, %c0_i32_1 : i32, i32, i32
  }
  func.func @transform_6(%arg0: i32, %arg1: i32) -> (i32, i32) {
    %c0_i32 = arith.constant 0 : i32
    %c0_i32_0 = arith.constant 0 : i32
    %c0_i32_1 = arith.constant 0 : i32
    return %c0_i32, %c0_i32_0 : i32, i32
  }
  func.func @transform_7(%arg0: i32, %arg1: i32) -> (i32, i32) {
    %c0_i32 = arith.constant 0 : i32
    %c0_i32_0 = arith.constant 0 : i32
    %c0_i32_1 = arith.constant 0 : i32
    return %c0_i32, %c0_i32_0 : i32, i32
  }
  func.func @transform_8(%arg0: i32, %arg1: i32) -> (i32, i32, i32) {
    %c0_i32 = arith.constant 0 : i32
    %c0_i32_0 = arith.constant 0 : i32
    return %arg0, %arg1, %c0_i32 : i32, i32, i32
  }
  func.func @transform_9(%arg0: i32, %arg1: i32) -> (i32, i32, i32) {
    %c0_i32 = arith.constant 0 : i32
    %c0_i32_0 = arith.constant 0 : i32
    return %arg0, %arg1, %c0_i32 : i32, i32, i32
  }
  func.func @transform_10(%arg0: i32, %arg1: i32) -> (i32, i32, i32) {
    %c0_i32 = arith.constant 0 : i32
    %c0_i32_0 = arith.constant 0 : i32
    %c0_i32_1 = arith.constant 0 : i32
    return %arg0, %c0_i32, %c0_i32_0 : i32, i32, i32
  }
  func.func @transform_11(%arg0: i32, %arg1: i32) -> (i32, i32, i32) {
    %c0_i32 = arith.constant 0 : i32
    %c0_i32_0 = arith.constant 0 : i32
    %c0_i32_1 = arith.constant 0 : i32
    return %arg0, %c0_i32, %c0_i32_0 : i32, i32, i32
  }
}

</mosaic_0001>

<llo_original>
// kernel: recurrent_block_forward.1
$region0: #{recurrent_block_forward.1}
  #allocation0 [shape = 'u32[]', space=smem, size = 0x4, offset = 0x4, fixed_abs, tag = 'smem constant byte address 0x4 - core index']
  #allocation1 [shape = 'u32[144,128]{1,0:T(1,128)}', space=vmem, size = 0x12000, scoped, tag = 'internal scratch']
  #allocation2 [shape = 'f32[40,128]{1,0:T(8,128)}', space=vmem, size = 0x5000, scoped, tag = 'scratch operand']
  #allocation3 [shape = 'f32[40,1]{1,0:T(8,128)}', space=vmem, size = 0x5000, scoped, tag = 'scratch operand']
  #allocation4 [shape = 'f32[1,128]{1,0:T(1,128)}', space=vmem, size = 0x200, scoped, tag = 'scratch operand']
  #allocation5 [shape = 'f32[32,256]{1,0:T(8,128)}', space=vmem, size = 0x8000, scoped, tag = 'scratch operand']
  %s0 = inlined_call_operand.vmem [shape: bf16[2,64,32], index: 0, kind: input, shape index: {}]
  %s1 = inlined_call_operand.vmem [shape: bf16[32,256], index: 1, kind: input, shape index: {}]
  %s2 = inlined_call_operand.vmem [shape: f32[1,256], index: 2, kind: input, shape index: {}]
  %s3 = inlined_call_operand.vmem [shape: f32[4,128], index: 3, kind: input, shape index: {}]
  %s4 = inlined_call_operand.vmem [shape: f32[1,128], index: 4, kind: input, shape index: {}]
  %s5 = inlined_call_operand.vmem [shape: bf16[4,32,64], index: 5, kind: input, shape index: {}]
  %s6 = inlined_call_operand.vmem [shape: f32[1,256], index: 6, kind: input, shape index: {}]
  %s7 = inlined_call_operand.vmem [shape: f32[1,128], index: 7, kind: input, shape index: {}]
  %s8 = inlined_call_operand.vmem [shape: f32[2,64,1], index: 8, kind: input, shape index: {}]
  %s9 = inlined_call_operand.hbm [shape: bf16[2,64,128], index: 9, kind: output, shape index: {0}]
  %s10 = inlined_call_operand.vmem [shape: f32[2,3,128], index: 10, kind: output, shape index: {1}]
  %s11 = inlined_call_operand.hbm [shape: f32[2,1,128], index: 11, kind: output, shape index: {2}]
  %12 = xla_tuple %s9, %s10, %s11
  %s13 = sld [smem:[#allocation0]]
  $region93: #{recurrent_block_forward.1} parent=0
    _
  %s15 = ssub.s32 1, %s13
  %s16 = scalar_select 0, %s15, %s13
  $region1: #{recurrent_block_forward.1} parent=0
    #allocation6 [shape = 'u8[16384]{0}', space=vmem, size = 0x4000, scoped, tag = 'output window, operand 0']
    #allocation7 [shape = 's32[2]{0}', space=sflag, size = 0x8, scoped, tag = 'scoped memory for recurrent_block_forward.1']
    #allocation8 [shape = 'u8[1024]{0}', space=vmem, size = 0x400, scoped, tag = 'output window, operand 2']
    #allocation9 [shape = 's32[2]{0}', space=sflag, size = 0x8, scoped, tag = 'scoped memory for recurrent_block_forward.1']
    %17 = vsyncpa [#allocation7], 0
    %s18 = scalar_lea.sflag [#allocation7], 1
    %19 = vsyncpa %s18, 0
    %20 = vsyncpa [#allocation9], 0
    %s21 = scalar_lea.sflag [#allocation9], 1
    %22 = vsyncpa %s21, 0
    loop: start=0, step=1, limit=6
    $region2: #{recurrent_block_forward.1} parent=1 // loop_pre_header
      _
    $region3: #{recurrent_block_forward.1} parent=1 // loop_header
      %s24 = sphi 0, %s28
      %p25 = scmp.ge.s32.totalorder %s24, 6
      %s31 = sphi 0, %s43
      %s32 = sphi 0, %s39
      %s33 = sphi 0, %s31
      %s34 = sphi 0, %s32
      %s35 = sphi 0, %s33
      %s36 = sphi 0, %s34
      %s48 = sphi 0, %s50
      %s51 = sphi 0, %s48
      %s52 = sphi 0, %s51
      %s68 = sphi 0, %s52
      %s72 = sphi 0, %s72
      %s74 = sphi 0, %s72
      %s75 = sphi 0, %s74
      %s89 = sphi 0, %s75
      %s93 = sphi 0, %s93
      %s95 = sphi 0, %s93
      %s96 = sphi 0, %s95
      %s110 = sphi 0, %s96
      %s114 = sphi 0, %s114
      %s116 = sphi 0, %s114
      %s117 = sphi 0, %s116
      %s131 = sphi 0, %s117
      %s135 = sphi 0, %s135
      %s137 = sphi 0, %s135
      %s138 = sphi 0, %s137
      %s152 = sphi 0, %s138
      %s156 = sphi 0, %s156
      %s158 = sphi 0, %s156
      %s159 = sphi 0, %s158
      %s173 = sphi 0, %s159
      %s177 = sphi 0, %s177
      %s179 = sphi 0, %s177
      %s180 = sphi 0, %s179
      %s194 = sphi 0, %s180
      %s198 = sphi 0, %s198
      %s200 = sphi 0, %s198
      %s201 = sphi 0, %s200
      %s215 = sphi 0, %s201
      %s223 = sphi 0, %s225
      %s226 = sphi 0, %s223
      %s227 = sphi 0, %s226
      %s243 = sphi 0, %s227
      %s251 = sphi 0, %s253
      %s254 = sphi 0, %s251
      %s255 = sphi 0, %s254
      %s271 = sphi 0, %s255
      %s277 = sphi 0, %s279
      %s280 = sphi 0, %s277
      %s281 = sphi 0, %s280
      %s297 = sphi 0, %s281
      %s303 = sphi 0, %s305
      %s306 = sphi 0, %s303
      %s307 = sphi 0, %s306
      %s323 = sphi 0, %s307
    $region4: #{recurrent_block_forward.1} parent=1 // loop_header_branch
      %27 = sbr.rel (%p25) target = $region8
    $region5: #{recurrent_block_forward.1} parent=1 // loop_body
      %s29 = ssub.s32 %s24, 1
      %s30 = ssub.s32 %s24, 2
      %s37 = sadd.s32 1, %s32
      %p38 = scmp.ge.s32.totalorder %s37, 2
      %s39 = scalar_select %p38, 0, %s37
      %s40 = sadd.s32 1, %s31
      %s41 = scalar_select %p38, %s40, %s31
      %p42 = scmp.ge.s32.totalorder %s41, 2
      %s43 = scalar_select %p42, 0, %s41
      %s44 = ssub.s32 %s31, %s43
      %s45 = ssub.s32 %s32, %s39
      %s46 = sor.u32 %s44, %s45
      %p47 = scmp.eq.s32.totalorder %s46, 0
      %s49 = sadd.s32 %s48, 1
      %s50 = scalar_select %p47, %s48, %s49
      %p53 = pneg %p47
      %p54 = scmp.eq.s32.totalorder %s24, 3
      %p55 = por %p53, %p54
      %p56 = scmp.ne.s32.totalorder %s48, %s51
      %p57 = scmp.eq.s32.totalorder %s24, 0
      %p58 = por %p56, %p57
      %p59 = scmp.ne.s32.totalorder %s48, %s51
      %p60 = scmp.eq.s32.totalorder %s29, 3
      %p61 = por %p59, %p60
      %p62 = scmp.ne.s32.totalorder %s51, %s52
      %p63 = scmp.eq.s32.totalorder %s29, 0
      %p64 = por %p62, %p63
      %p65 = scmp.ne.s32.totalorder %s51, %s52
      %p66 = scmp.eq.s32.totalorder %s30, 3
      %p67 = por %p65, %p66
      %p69 = scmp.ne.s32.totalorder %s52, %s68
      %p70 = scmp.eq.s32.totalorder %s30, 0
      %p71 = por %p69, %p70
      %s73 = sadd.s32 %s72, 1
      %p76 = scmp.eq.s32.totalorder %s24, 3
      %p77 = scmp.ne.s32.totalorder %s72, %s74
      %p78 = scmp.eq.s32.totalorder %s24, 0
      %p79 = por %p77, %p78
      %p80 = scmp.ne.s32.totalorder %s72, %s74
      %p81 = scmp.eq.s32.totalorder %s29, 3
      %p82 = por %p80, %p81
      %p83 = scmp.ne.s32.totalorder %s74, %s75
      %p84 = scmp.eq.s32.totalorder %s29, 0
      %p85 = por %p83, %p84
      %p86 = scmp.ne.s32.totalorder %s74, %s75
      %p87 = scmp.eq.s32.totalorder %s30, 3
      %p88 = por %p86, %p87
      %p90 = scmp.ne.s32.totalorder %s75, %s89
      %p91 = scmp.eq.s32.totalorder %s30, 0
      %p92 = por %p90, %p91
      %s94 = sadd.s32 %s93, 1
      %p97 = scmp.eq.s32.totalorder %s24, 3
      %p98 = scmp.ne.s32.totalorder %s93, %s95
      %p99 = scmp.eq.s32.totalorder %s24, 0
      %p100 = por %p98, %p99
      %p101 = scmp.ne.s32.totalorder %s93, %s95
      %p102 = scmp.eq.s32.totalorder %s29, 3
      %p103 = por %p101, %p102
      %p104 = scmp.ne.s32.totalorder %s95, %s96
      %p105 = scmp.eq.s32.totalorder %s29, 0
      %p106 = por %p104, %p105
      %p107 = scmp.ne.s32.totalorder %s95, %s96
      %p108 = scmp.eq.s32.totalorder %s30, 3
      %p109 = por %p107, %p108
      %p111 = scmp.ne.s32.totalorder %s96, %s110
      %p112 = scmp.eq.s32.totalorder %s30, 0
      %p113 = por %p111, %p112
      %s115 = sadd.s32 %s114, 1
      %p118 = scmp.eq.s32.totalorder %s24, 3
      %p119 = scmp.ne.s32.totalorder %s114, %s116
      %p120 = scmp.eq.s32.totalorder %s24, 0
      %p121 = por %p119, %p120
      %p122 = scmp.ne.s32.totalorder %s114, %s116
      %p123 = scmp.eq.s32.totalorder %s29, 3
      %p124 = por %p122, %p123
      %p125 = scmp.ne.s32.totalorder %s116, %s117
      %p126 = scmp.eq.s32.totalorder %s29, 0
      %p127 = por %p125, %p126
      %p128 = scmp.ne.s32.totalorder %s116, %s117
      %p129 = scmp.eq.s32.totalorder %s30, 3
      %p130 = por %p128, %p129
      %p132 = scmp.ne.s32.totalorder %s117, %s131
      %p133 = scmp.eq.s32.totalorder %s30, 0
      %p134 = por %p132, %p133
      %s136 = sadd.s32 %s135, 1
      %p139 = scmp.eq.s32.totalorder %s24, 3
      %p140 = scmp.ne.s32.totalorder %s135, %s137
      %p141 = scmp.eq.s32.totalorder %s24, 0
      %p142 = por %p140, %p141
      %p143 = scmp.ne.s32.totalorder %s135, %s137
      %p144 = scmp.eq.s32.totalorder %s29, 3
      %p145 = por %p143, %p144
      %p146 = scmp.ne.s32.totalorder %s137, %s138
      %p147 = scmp.eq.s32.totalorder %s29, 0
      %p148 = por %p146, %p147
      %p149 = scmp.ne.s32.totalorder %s137, %s138
      %p150 = scmp.eq.s32.totalorder %s30, 3
      %p151 = por %p149, %p150
      %p153 = scmp.ne.s32.totalorder %s138, %s152
      %p154 = scmp.eq.s32.totalorder %s30, 0
      %p155 = por %p153, %p154
      %s157 = sadd.s32 %s156, 1
      %p160 = scmp.eq.s32.totalorder %s24, 3
      %p161 = scmp.ne.s32.totalorder %s156, %s158
      %p162 = scmp.eq.s32.totalorder %s24, 0
      %p163 = por %p161, %p162
      %p164 = scmp.ne.s32.totalorder %s156, %s158
      %p165 = scmp.eq.s32.totalorder %s29, 3
      %p166 = por %p164, %p165
      %p167 = scmp.ne.s32.totalorder %s158, %s159
      %p168 = scmp.eq.s32.totalorder %s29, 0
      %p169 = por %p167, %p168
      %p170 = scmp.ne.s32.totalorder %s158, %s159
      %p171 = scmp.eq.s32.totalorder %s30, 3
      %p172 = por %p170, %p171
      %p174 = scmp.ne.s32.totalorder %s159, %s173
      %p175 = scmp.eq.s32.totalorder %s30, 0
      %p176 = por %p174, %p175
      %s178 = sadd.s32 %s177, 1
      %p181 = scmp.eq.s32.totalorder %s24, 3
      %p182 = scmp.ne.s32.totalorder %s177, %s179
      %p183 = scmp.eq.s32.totalorder %s24, 0
      %p184 = por %p182, %p183
      %p185 = scmp.ne.s32.totalorder %s177, %s179
      %p186 = scmp.eq.s32.totalorder %s29, 3
      %p187 = por %p185, %p186
      %p188 = scmp.ne.s32.totalorder %s179, %s180
      %p189 = scmp.eq.s32.totalorder %s29, 0
      %p190 = por %p188, %p189
      %p191 = scmp.ne.s32.totalorder %s179, %s180
      %p192 = scmp.eq.s32.totalorder %s30, 3
      %p193 = por %p191, %p192
      %p195 = scmp.ne.s32.totalorder %s180, %s194
      %p196 = scmp.eq.s32.totalorder %s30, 0
      %p197 = por %p195, %p196
      %s199 = sadd.s32 %s198, 1
      %p202 = scmp.eq.s32.totalorder %s24, 3
      %p203 = scmp.ne.s32.totalorder %s198, %s200
      %p204 = scmp.eq.s32.totalorder %s24, 0
      %p205 = por %p203, %p204
      %p206 = scmp.ne.s32.totalorder %s198, %s200
      %p207 = scmp.eq.s32.totalorder %s29, 3
      %p208 = por %p206, %p207
      %p209 = scmp.ne.s32.totalorder %s200, %s201
      %p210 = scmp.eq.s32.totalorder %s29, 0
      %p211 = por %p209, %p210
      %p212 = scmp.ne.s32.totalorder %s200, %s201
      %p213 = scmp.eq.s32.totalorder %s30, 3
      %p214 = por %p212, %p213
      %p216 = scmp.ne.s32.totalorder %s201, %s215
      %p217 = scmp.eq.s32.totalorder %s30, 0
      %p218 = por %p216, %p217
      %s219 = ssub.s32 %s31, %s43
      %s220 = ssub.s32 %s32, %s39
      %s221 = sor.u32 %s219, %s220
      %p222 = scmp.eq.s32.totalorder %s221, 0
      %s224 = sadd.s32 %s223, 1
      %s225 = scalar_select %p222, %s223, %s224
      %p228 = pneg %p222
      %p229 = scmp.eq.s32.totalorder %s24, 3
      %p230 = por %p228, %p229
      %p231 = scmp.ne.s32.totalorder %s223, %s226
      %p232 = scmp.eq.s32.totalorder %s24, 0
      %p233 = por %p231, %p232
      %p234 = scmp.ne.s32.totalorder %s223, %s226
      %p235 = scmp.eq.s32.totalorder %s29, 3
      %p236 = por %p234, %p235
      %p237 = scmp.ne.s32.totalorder %s226, %s227
      %p238 = scmp.eq.s32.totalorder %s29, 0
      %p239 = por %p237, %p238
      %p240 = scmp.ne.s32.totalorder %s226, %s227
      %p241 = scmp.eq.s32.totalorder %s30, 3
      %p242 = por %p240, %p241
      %p244 = scmp.ne.s32.totalorder %s227, %s243
      %p245 = scmp.eq.s32.totalorder %s30, 0
      %p246 = por %p244, %p245
      %s247 = ssub.s32 %s31, %s43
      %s248 = ssub.s32 %s32, %s39
      %s249 = sor.u32 %s247, %s248
      %p250 = scmp.eq.s32.totalorder %s249, 0
      %s252 = sadd.s32 %s251, 1
      %s253 = scalar_select %p250, %s251, %s252
      %p256 = pneg %p250
      %p257 = scmp.eq.s32.totalorder %s24, 3
      %p258 = por %p256, %p257
      %p259 = scmp.ne.s32.totalorder %s251, %s254
      %p260 = scmp.eq.s32.totalorder %s24, 0
      %p261 = por %p259, %p260
      %p262 = scmp.ne.s32.totalorder %s251, %s254
      %p263 = scmp.eq.s32.totalorder %s29, 3
      %p264 = por %p262, %p263
      %p265 = scmp.ne.s32.totalorder %s254, %s255
      %p266 = scmp.eq.s32.totalorder %s29, 0
      %p267 = por %p265, %p266
      %p268 = scmp.ne.s32.totalorder %s254, %s255
      %p269 = scmp.eq.s32.totalorder %s30, 3
      %p270 = por %p268, %p269
      %p272 = scmp.ne.s32.totalorder %s255, %s271
      %p273 = scmp.eq.s32.totalorder %s30, 0
      %p274 = por %p272, %p273
      %s275 = ssub.s32 %s31, %s43
      %p276 = scmp.eq.s32.totalorder %s275, 0
      %s278 = sadd.s32 %s277, 1
      %s279 = scalar_select %p276, %s277, %s278
      %p282 = pneg %p276
      %p283 = scmp.eq.s32.totalorder %s24, 3
      %p284 = por %p282, %p283
      %p285 = scmp.ne.s32.totalorder %s277, %s280
      %p286 = scmp.eq.s32.totalorder %s24, 0
      %p287 = por %p285, %p286
      %p288 = scmp.ne.s32.totalorder %s277, %s280
      %p289 = scmp.eq.s32.totalorder %s29, 3
      %p290 = por %p288, %p289
      %p291 = scmp.ne.s32.totalorder %s280, %s281
      %p292 = scmp.eq.s32.totalorder %s29, 0
      %p293 = por %p291, %p292
      %p294 = scmp.ne.s32.totalorder %s280, %s281
      %p295 = scmp.eq.s32.totalorder %s30, 3
      %p296 = por %p294, %p295
      %p298 = scmp.ne.s32.totalorder %s281, %s297
      %p299 = scmp.eq.s32.totalorder %s30, 0
      %p300 = por %p298, %p299
      %s301 = ssub.s32 %s31, %s43
      %p302 = scmp.eq.s32.totalorder %s301, 0
      %s304 = sadd.s32 %s303, 1
      %s305 = scalar_select %p302, %s303, %s304
      %p308 = pneg %p302
      %p309 = scmp.eq.s32.totalorder %s24, 3
      %p310 = por %p308, %p309
      %p311 = scmp.ne.s32.totalorder %s303, %s306
      %p312 = scmp.eq.s32.totalorder %s24, 0
      %p313 = por %p311, %p312
      %p314 = scmp.ne.s32.totalorder %s303, %s306
      %p315 = scmp.eq.s32.totalorder %s29, 3
      %p316 = por %p314, %p315
      %p317 = scmp.ne.s32.totalorder %s306, %s307
      %p318 = scmp.eq.s32.totalorder %s29, 0
      %p319 = por %p317, %p318
      %p320 = scmp.ne.s32.totalorder %s306, %s307
      %p321 = scmp.eq.s32.totalorder %s30, 3
      %p322 = por %p320, %p321
      %p324 = scmp.ne.s32.totalorder %s307, %s323
      %p325 = scmp.eq.s32.totalorder %s30, 0
      %p326 = por %p324, %p325
      %p327 = scmp.le.s32.totalorder 1, %s24
      %p328 = scmp.lt.s32.totalorder %s24, 5
      %p329 = pnand %p327, %p328
      %p330 = pneg %p329
      // Predicated region
      $region9: #{recurrent_block_forward.1} parent=5 // pred_check
        _
      $region10: #{recurrent_block_forward.1} parent=5 // pred_check_branch
        %332 = sbr.rel (%p329) target = $region12
      $region11: #{recurrent_block_forward.1} parent=5 // pred_region
        %s333 = ssub.s32 %s24, 1
        // Predicated region
        $region13: #{recurrent_block_forward.1} parent=11 // pred_check
          %p334 = pneg %p85
        $region14: #{recurrent_block_forward.1} parent=11 // pred_check_branch
          %336 = sbr.rel (%p334) target = $region16
        $region15: #{recurrent_block_forward.1} parent=11 // pred_region
          _
        $region16: #{recurrent_block_forward.1} parent=11 // pred_fallthru
          _
        // Predicated region
        $region17: #{recurrent_block_forward.1} parent=11 // pred_check
          %p337 = pneg %p106
        $region18: #{recurrent_block_forward.1} parent=11 // pred_check_branch
          %339 = sbr.rel (%p337) target = $region20
        $region19: #{recurrent_block_forward.1} parent=11 // pred_region
          _
        $region20: #{recurrent_block_forward.1} parent=11 // pred_fallthru
          _
        // Predicated region
        $region21: #{recurrent_block_forward.1} parent=11 // pred_check
          %p340 = pneg %p127
        $region22: #{recurrent_block_forward.1} parent=11 // pred_check_branch
          %342 = sbr.rel (%p340) target = $region24
        $region23: #{recurrent_block_forward.1} parent=11 // pred_region
          _
        $region24: #{recurrent_block_forward.1} parent=11 // pred_fallthru
          _
        // Predicated region
        $region25: #{recurrent_block_forward.1} parent=11 // pred_check
          %p343 = pneg %p148
        $region26: #{recurrent_block_forward.1} parent=11 // pred_check_branch
          %345 = sbr.rel (%p343) target = $region28
        $region27: #{recurrent_block_forward.1} parent=11 // pred_region
          _
        $region28: #{recurrent_block_forward.1} parent=11 // pred_fallthru
          _
        // Predicated region
        $region29: #{recurrent_block_forward.1} parent=11 // pred_check
          %p346 = pneg %p169
        $region30: #{recurrent_block_forward.1} parent=11 // pred_check_branch
          %348 = sbr.rel (%p346) target = $region32
        $region31: #{recurrent_block_forward.1} parent=11 // pred_region
          _
        $region32: #{recurrent_block_forward.1} parent=11 // pred_fallthru
          _
        // Predicated region
        $region33: #{recurrent_block_forward.1} parent=11 // pred_check
          %p349 = pneg %p190
        $region34: #{recurrent_block_forward.1} parent=11 // pred_check_branch
          %351 = sbr.rel (%p349) target = $region36
        $region35: #{recurrent_block_forward.1} parent=11 // pred_region
          _
        $region36: #{recurrent_block_forward.1} parent=11 // pred_fallthru
          _
        // Predicated region
        $region37: #{recurrent_block_forward.1} parent=11 // pred_check
          %p352 = pneg %p211
        $region38: #{recurrent_block_forward.1} parent=11 // pred_check_branch
          %354 = sbr.rel (%p352) target = $region40
        $region39: #{recurrent_block_forward.1} parent=11 // pred_region
          _
        $region40: #{recurrent_block_forward.1} parent=11 // pred_fallthru
          _
      $region12: #{recurrent_block_forward.1} parent=5 // pred_fallthru
        _
      %p355 = scmp.lt.s32.totalorder %s24, 4
      // Predicated region
      $region41: #{recurrent_block_forward.1} parent=5 // pred_check
        %p356 = pneg %p355
      $region42: #{recurrent_block_forward.1} parent=5 // pred_check_branch
        %358 = sbr.rel (%p356) target = $region44
      $region43: #{recurrent_block_forward.1} parent=5 // pred_region
        // Predicated region
        $region45: #{recurrent_block_forward.1} parent=43 // pred_check
          %p359 = pneg %p58
        $region46: #{recurrent_block_forward.1} parent=43 // pred_check_branch
          %361 = sbr.rel (%p359) target = $region48
        $region47: #{recurrent_block_forward.1} parent=43 // pred_region
          %s362 = smul.u32 4, %s32
          %p363 = scmp.lt.s32.totalorder %s31, 1
          %s364 = scalar_select %p363, %s31, 1
          %p365 = scmp.lt.s32.totalorder %s362, 7
          %s366 = scalar_select %p365, %s362, 7
          %s367 = smul.addr %s364, 8
          %s368 = sadd.s32 %s366, %s367
          %s369 = smul.addr %s368, 4
          %s370 = scalar_lea.vmem %s0, %s369
          %s371 = smul.u32 4, %s32
        $region48: #{recurrent_block_forward.1} parent=43 // pred_fallthru
          _
        // Predicated region
        $region49: #{recurrent_block_forward.1} parent=43 // pred_check
          %p372 = pneg %p233
        $region50: #{recurrent_block_forward.1} parent=43 // pred_check_branch
          %374 = sbr.rel (%p372) target = $region52
        $region51: #{recurrent_block_forward.1} parent=43 // pred_region
          %s375 = smul.u32 4, %s32
          %p376 = scmp.lt.s32.totalorder %s31, 1
          %s377 = scalar_select %p376, %s31, 1
          %p378 = scmp.lt.s32.totalorder %s375, 7
          %s379 = scalar_select %p378, %s375, 7
          %s380 = smul.addr %s377, 8
          %s381 = sadd.s32 %s379, %s380
          %s382 = smul.addr %s381, 8
          %s383 = scalar_lea.vmem %s8, %s382
          %s384 = smul.u32 4, %s32
        $region52: #{recurrent_block_forward.1} parent=43 // pred_fallthru
          _
      $region44: #{recurrent_block_forward.1} parent=5 // pred_fallthru
        _
      %p385 = scmp.le.s32.totalorder 1, %s24
      %p386 = scmp.lt.s32.totalorder %s24, 5
      %p387 = pnand %p385, %p386
      %p388 = pneg %p387
      // Predicated region
      $region53: #{recurrent_block_forward.1} parent=5 // pred_check
        _
      $region54: #{recurrent_block_forward.1} parent=5 // pred_check_branch
        %390 = sbr.rel (%p387) target = $region56
      $region55: #{recurrent_block_forward.1} parent=5 // pred_region
        %s391 = ssub.s32 %s24, 1
        %s392 = smul.u32 4, %s34
        %p393 = scmp.lt.s32.totalorder %s33, 1
        %s394 = scalar_select %p393, %s33, 1
        %p395 = scmp.lt.s32.totalorder %s392, 7
        %s396 = scalar_select %p395, %s392, 7
        %s397 = smul.addr %s394, 8
        %s398 = sadd.s32 %s396, %s397
        %s399 = smul.addr %s398, 4
        %s400 = scalar_lea.vmem %s0, %s399
        %p401 = pneg %p64
        %p402 = pneg %p61
        %p403 = pneg %p85
        %p404 = pneg %p82
        %p405 = pneg %p106
        %p406 = pneg %p103
        %p407 = pneg %p127
        %p408 = pneg %p124
        %p409 = pneg %p148
        %p410 = pneg %p145
        %p411 = pneg %p169
        %p412 = pneg %p166
        %p413 = pneg %p190
        %p414 = pneg %p187
        %p415 = pneg %p211
        %p416 = pneg %p208
        %s417 = smul.u32 4, %s34
        %p418 = scmp.lt.s32.totalorder %s33, 1
        %s419 = scalar_select %p418, %s33, 1
        %p420 = scmp.lt.s32.totalorder %s417, 7
        %s421 = scalar_select %p420, %s417, 7
        %s422 = smul.addr %s419, 8
        %s423 = sadd.s32 %s421, %s422
        %s424 = smul.addr %s423, 8
        %s425 = scalar_lea.vmem %s8, %s424
        %p426 = pneg %p239
        %p427 = pneg %p236
        %p428 = pneg %p267
        %p429 = pneg %p264
        %s430 = sand.u32 %s254, 1
        %s431 = scalar_lea.sflag [#allocation7], %s430
        %s432 = sand.u32 %s254, 1
        %s433 = smul.addr %s432, 16
        %s434 = scalar_lea.vmem [#allocation6], %s433
        %p435 = pneg %p293
        %p436 = pneg %p290
        %p437 = scmp.lt.s32.totalorder %s33, 1
        %s438 = scalar_select %p437, %s33, 1
        %s439 = smul.addr %s438, 4
        %s440 = scalar_lea.vmem %s10, %s439
        %p441 = pneg %p319
        %p442 = pneg %p316
        %s443 = sand.u32 %s306, 1
        %s444 = scalar_lea.sflag [#allocation9], %s443
        %s445 = sand.u32 %s306, 1
        %s446 = scalar_lea.vmem [#allocation8], %s445
        %s447 = smul.u32 4, %s34
        %p448 = scmp.lt.s32.totalorder %s33, 1
        %s449 = scalar_select %p448, %s33, 1
        %p450 = scmp.lt.s32.totalorder %s447, 7
        %s451 = scalar_select %p450, %s447, 7
        %s452 = smul.addr %s449, 8
        %s453 = sadd.s32 %s451, %s452
        %s454 = smul.addr %s453, 4
        %s455 = scalar_lea.vmem %s0, %s454
        %s456 = smul.u32 4, %s34
        %s457 = smul.u32 4, %s34
        %p458 = scmp.lt.s32.totalorder %s33, 1
        %s459 = scalar_select %p458, %s33, 1
        %p460 = scmp.lt.s32.totalorder %s457, 7
        %s461 = scalar_select %p460, %s457, 7
        %s462 = smul.addr %s459, 8
        %s463 = sadd.s32 %s461, %s462
        %s464 = smul.addr %s463, 8
        %s465 = scalar_lea.vmem %s8, %s464
        %s466 = smul.u32 4, %s34
        %s467 = smul.u32 4, %s34
        %p468 = scmp.lt.s32.totalorder %s33, 1
        %s469 = scalar_select %p468, %s33, 1
        %s470 = smul.addr %s469, 4
        %s471 = scalar_lea.vmem %s10, %s470
        %p473 = scmp.eq.s32.totalorder %s34, 0
        // Predicated region
        $region57: #{recurrent_block_forward.1} parent=55 // pred_check
          %p474 = pneg %p473
        $region58: #{recurrent_block_forward.1} parent=55 // pred_check_branch
          %476 = sbr.rel (%p474) target = $region60
        $region59: #{recurrent_block_forward.1} parent=55 // pred_region
          %477 = vst [vmem:[#allocation2] sm:$0xff] 0.0
          %vm478 = vcmask 7168
          %479 = vst.msk [vmem:[#allocation3] sm:$0xff] %vm478, 1.0
          %480 = vst [vmem:[#allocation4] sm:$0x1] 0.0
        $region60: #{recurrent_block_forward.1} parent=55 // pred_fallthru
          _
        %v481 = vld [vmem:[%s455] sm:$0xf]
        %v482 = vld [vmem:[%s455 + $0x4] sm:$0xf]
        %v483 = vld [vmem:[%s455 + $0x8] sm:$0xf]
        %v484 = vld [vmem:[%s455 + $0xc] sm:$0xf]
        %v485 = vld [vmem:[%s465] sm:$0xff]
        %v486 = vld [vmem:[%s465 + $0x8] sm:$0xff]
        %v487 = vld [vmem:[%s465 + $0x10] sm:$0xff]
        %v488 = vld [vmem:[%s465 + $0x18] sm:$0xff]
        %490 = vset.pattern.permute.xlu0 0
        %491 = vperm.xlu0 %490, %v485
        %v492 = vpop.permute.xlu0 %491
        %495 = vset.pattern.permute.xlu0 0
        %496 = vperm.xlu0 %495, %v486
        %v497 = vpop.permute.xlu0 %496
        %500 = vset.pattern.permute.xlu0 0
        %501 = vperm.xlu0 %500, %v487
        %v502 = vpop.permute.xlu0 %501
        %505 = vset.pattern.permute.xlu0 0
        %506 = vperm.xlu0 %505, %v488
        %v507 = vpop.permute.xlu0 %506
        %v509 = vld [vmem:[%s1] sm:$0xff]
        %v510 = vld [vmem:[%s1 + $0x8] sm:$0xff]
        %v511 = vld [vmem:[%s1 + $0x10] sm:$0xff]
        %v512 = vld [vmem:[%s1 + $0x18] sm:$0xff]
        %v513 = vld [vmem:[%s2] sm:$0x3]
        %v515 = vlaneseq
        %v516 = vshrl.u32 %v515, 7
        %v517 = vsub.s32 0, %v516
        %v518 = vrot.slane %v513, %v517
        %v519 = vlaneseq
        %v520 = vshrl.u32 %v519, 7
        %v521 = vsub.s32 1, %v520
        %v522 = vrot.slane %v513, %v521
        %v529 = vunpack.c.l.b16 %v481
        %v530 = vunpack.c.l.b16 %v482
        %v531 = vunpack.c.l.b16 %v483
        %v532 = vunpack.c.l.b16 %v484
        %v533 = vpack.c.b16 %v530, %v529
        %v534 = vpack.c.b16 %v532, %v531
        %v539 = vunpack.c.l.b16 %v509
        %v540 = vunpack.c.h.b16 %v509
        %v541 = vunpack.c.l.b16 %v510
        %v542 = vunpack.c.h.b16 %v510
        %v543 = vunpack.c.l.b16 %v511
        %v544 = vunpack.c.h.b16 %v511
        %v545 = vunpack.c.l.b16 %v512
        %v546 = vunpack.c.h.b16 %v512
        %v547 = vpack.c.b16 %v541, %v539
        %v548 = vpack.c.b16 %v542, %v540
        %v549 = vpack.c.b16 %v545, %v543
        %v550 = vpack.c.b16 %v546, %v544
        %vm555 = vcmask 261120
        %v557 = vsel %vm555, %v533, 0
        %v560 = vsel %vm555, %v534, 0
        %562 = vmatprep.subr.bf16.mxu0 %v548
        %563 = vmatpush1.bf16.msra.mxu0 %v547
        %564 = vmatprep.subr.bf16.mxu0 %v550
        %565 = vmatpush1.bf16.msra.mxu0 %v549
        %566 = vmatprep.subr.bf16.mxu0 0
        %567 = vmatpush1.bf16.msra.mxu0 0
        %568 = vmatprep.subr.bf16.mxu0 0
        %569 = vmatpush1.bf16.msra.mxu0 0
        %570 = vmatprep.subr.bf16.mxu0 0
        %571 = vmatpush1.bf16.msra.mxu0 0
        %572 = vmatprep.subr.bf16.mxu0 0
        %573 = vmatpush1.bf16.msra.mxu0 0
        %574 = vmatprep.subr.bf16.mxu0 0
        %575 = vmatpush1.bf16.msra.mxu0 0
        %576 = vmatprep.subr.bf16.mxu0 0
        %577 = vmatpush1.bf16.msra.mxu0 0
        %578 = vmatprep.subr.bf16.mxu0 0
        %579 = vmatpush1.bf16.msra.mxu0 0
        %580 = vmatprep.subr.bf16.mxu0 0
        %581 = vmatpush1.bf16.msra.mxu0 0
        %582 = vmatprep.subr.bf16.mxu0 0
        %583 = vmatpush1.bf16.msra.mxu0 0
        %584 = vmatprep.subr.bf16.mxu0 0
        %585 = vmatpush1.bf16.msra.mxu0 0
        %586 = vmatprep.subr.bf16.mxu0 0
        %587 = vmatpush1.bf16.msra.mxu0 0
        %588 = vmatprep.subr.bf16.mxu0 0
        %589 = vmatpush1.bf16.msra.mxu0 0
        %590 = vmatprep.subr.bf16.mxu0 0
        %591 = vmatpush1.bf16.msra.mxu0 0
        %592 = vmatprep.subr.bf16.mxu0 0
        %593 = vmatpush1.bf16.msra.mxu0 0
        %594 = vmatprep.mubr.bf16.mxu0 0
        %595 = vmatmul.mubr.bf16.gmra.mrb[0].mxu0 %v557
        %v596 = vpop.f32.mrb[0].mxu0
        %v597 = vadd.f32 %v518, %v596
        %v598 = vpop.f32.mrb[0].mxu0
        %v599 = vadd.f32 %v522, %v598
        %v600 = vpop.f32.mrb[0].mxu0
        %v601 = vadd.f32 %v518, %v600
        %v602 = vpop.f32.mrb[0].mxu0
        %v603 = vadd.f32 %v522, %v602
        %604 = vmatprep.mubr.bf16.mxu0 0
        %605 = vmatmul.mubr.bf16.gmra.mrb[0].mxu0 %v560
        %v606 = vpop.f32.mrb[0].mxu0
        %v607 = vadd.f32 %v518, %v606
        %v608 = vpop.f32.mrb[0].mxu0
        %v609 = vadd.f32 %v522, %v608
        %v610 = vpop.f32.mrb[0].mxu0
        %v611 = vadd.f32 %v518, %v610
        %v612 = vpop.f32.mrb[0].mxu0
        %v613 = vadd.f32 %v522, %v612
        %614 = vdwg.mxu0
        %v615 = vmul.f32 %v597, 0.5
        %v616 = vmul.f32 %v601, 0.5
        %v617 = vmul.f32 %v607, 0.5
        %v618 = vmul.f32 %v611, 0.5
        %v619 = vmul.f32 %v597, 0.044715
        %v620 = vmul.f32 %v601, 0.044715
        %v621 = vmul.f32 %v607, 0.044715
        %v622 = vmul.f32 %v611, 0.044715
        %v623 = vmul.f32 %v619, %v597
        %v624 = vmul.f32 %v620, %v601
        %v625 = vmul.f32 %v621, %v607
        %v626 = vmul.f32 %v622, %v611
        %v627 = vmul.f32 %v623, %v597
        %v628 = vmul.f32 %v624, %v601
        %v629 = vmul.f32 %v625, %v607
        %v630 = vmul.f32 %v626, %v611
        %v631 = vadd.f32 %v597, %v627
        %v632 = vadd.f32 %v601, %v628
        %v633 = vadd.f32 %v607, %v629
        %v634 = vadd.f32 %v611, %v630
        %v635 = vmul.f32 %v631, 0.7978846
        %v636 = vmul.f32 %v632, 0.7978846
        %v637 = vmul.f32 %v633, 0.7978846
        %v638 = vmul.f32 %v634, 0.7978846
        %v639 = vtanh.pop %v635
        %v640 = vtanh.pop %v636
        %v641 = vtanh.pop %v637
        %v642 = vtanh.pop %v638
        %v643 = vadd.f32 %v639, 1.0
        %v644 = vadd.f32 %v640, 1.0
        %v645 = vadd.f32 %v641, 1.0
        %v646 = vadd.f32 %v642, 1.0
        %v647 = vmul.f32 %v615, %v643
        %v648 = vmul.f32 %v616, %v644
        %v649 = vmul.f32 %v617, %v645
        %v650 = vmul.f32 %v618, %v646
        %651 = vst [vmem:[#allocation2 + $0x8] sm:$0xff] %v599
        %652 = vst [vmem:[#allocation2 + $0x10] sm:$0xff] %v603
        %653 = vst [vmem:[#allocation2 + $0x18] sm:$0xff] %v609
        %654 = vst [vmem:[#allocation2 + $0x20] sm:$0xff] %v613
        %vm655 = vcmask 7168
        %656 = vst.msk [vmem:[#allocation3 + $0x8] sm:$0xff] %vm655, %v485
        %657 = vst.msk [vmem:[#allocation3 + $0x10] sm:$0xff] %vm655, %v486
        %658 = vst.msk [vmem:[#allocation3 + $0x18] sm:$0xff] %vm655, %v487
        %659 = vst.msk [vmem:[#allocation3 + $0x20] sm:$0xff] %vm655, %v488
        %v660 = vld [vmem:[%s3 + $0x3] sm:$0x1]
        %v661 = vlaneseq
        %v662 = vshrl.u32 %v661, 7
        %v663 = vsub.s32 0, %v662
        %v664 = vrot.slane %v660, %v663
        %v665 = vmul.f32 %v599, %v664
        %v666 = vmul.f32 %v603, %v664
        %v667 = vmul.f32 %v609, %v664
        %v668 = vmul.f32 %v613, %v664
        %v669 = vld [vmem:[#allocation2 + $0x7] sm:$0xff]
        %v670 = vld [vmem:[#allocation2 + $0xf] sm:$0xff]
        %v671 = vld [vmem:[#allocation2 + $0x17] sm:$0xff]
        %v672 = vld [vmem:[#allocation2 + $0x1f] sm:$0xff]
        %v673 = vmul.f32 %v669, %v492
        %v674 = vmul.f32 %v670, %v497
        %v675 = vmul.f32 %v671, %v502
        %v676 = vmul.f32 %v672, %v507
        %v677 = vld [vmem:[%s3 + $0x2] sm:$0x1]
        %v678 = vlaneseq
        %v679 = vshrl.u32 %v678, 7
        %v680 = vsub.s32 0, %v679
        %v681 = vrot.slane %v677, %v680
        %v682 = vmul.f32 %v673, %v681
        %v683 = vmul.f32 %v674, %v681
        %v684 = vmul.f32 %v675, %v681
        %v685 = vmul.f32 %v676, %v681
        %v686 = vadd.f32 %v665, %v682
        %v687 = vadd.f32 %v666, %v683
        %v688 = vadd.f32 %v667, %v684
        %v689 = vadd.f32 %v668, %v685
        %v690 = vld [vmem:[#allocation3 + $0x7] sm:$0xff]
        %v691 = vld [vmem:[#allocation3 + $0xf] sm:$0xff]
        %v692 = vld [vmem:[#allocation3 + $0x17] sm:$0xff]
        %v693 = vld [vmem:[#allocation3 + $0x1f] sm:$0xff]
        %695 = vset.pattern.permute.xlu0 0
        %696 = vperm.xlu0 %695, %v690
        %v697 = vpop.permute.xlu0 %696
        %700 = vset.pattern.permute.xlu0 0
        %701 = vperm.xlu0 %700, %v691
        %v702 = vpop.permute.xlu0 %701
        %705 = vset.pattern.permute.xlu0 0
        %706 = vperm.xlu0 %705, %v692
        %v707 = vpop.permute.xlu0 %706
        %710 = vset.pattern.permute.xlu0 0
        %711 = vperm.xlu0 %710, %v693
        %v712 = vpop.permute.xlu0 %711
        %v714 = vmul.f32 %v492, %v697
        %v715 = vmul.f32 %v497, %v702
        %v716 = vmul.f32 %v502, %v707
        %v717 = vmul.f32 %v507, %v712
        %v718 = vld [vmem:[#allocation2 + $0x6] sm:$0xff]
        %v719 = vld [vmem:[#allocation2 + $0xe] sm:$0xff]
        %v720 = vld [vmem:[#allocation2 + $0x16] sm:$0xff]
        %v721 = vld [vmem:[#allocation2 + $0x1e] sm:$0xff]
        %v722 = vmul.f32 %v718, %v714
        %v723 = vmul.f32 %v719, %v715
        %v724 = vmul.f32 %v720, %v716
        %v725 = vmul.f32 %v721, %v717
        %v726 = vld [vmem:[%s3 + $0x1] sm:$0x1]
        %v727 = vlaneseq
        %v728 = vshrl.u32 %v727, 7
        %v729 = vsub.s32 0, %v728
        %v730 = vrot.slane %v726, %v729
        %v731 = vmul.f32 %v722, %v730
        %v732 = vmul.f32 %v723, %v730
        %v733 = vmul.f32 %v724, %v730
        %v734 = vmul.f32 %v725, %v730
        %v735 = vadd.f32 %v686, %v731
        %v736 = vadd.f32 %v687, %v732
        %v737 = vadd.f32 %v688, %v733
        %v738 = vadd.f32 %v689, %v734
        %v739 = vld [vmem:[#allocation3 + $0x6] sm:$0xff]
        %v740 = vld [vmem:[#allocation3 + $0xe] sm:$0xff]
        %v741 = vld [vmem:[#allocation3 + $0x16] sm:$0xff]
        %v742 = vld [vmem:[#allocation3 + $0x1e] sm:$0xff]
        %744 = vset.pattern.permute.xlu0 0
        %745 = vperm.xlu0 %744, %v739
        %v746 = vpop.permute.xlu0 %745
        %749 = vset.pattern.permute.xlu0 0
        %750 = vperm.xlu0 %749, %v740
        %v751 = vpop.permute.xlu0 %750
        %754 = vset.pattern.permute.xlu0 0
        %755 = vperm.xlu0 %754, %v741
        %v756 = vpop.permute.xlu0 %755
        %759 = vset.pattern.permute.xlu0 0
        %760 = vperm.xlu0 %759, %v742
        %v761 = vpop.permute.xlu0 %760
        %v763 = vmul.f32 %v714, %v746
        %v764 = vmul.f32 %v715, %v751
        %v765 = vmul.f32 %v716, %v756
        %v766 = vmul.f32 %v717, %v761
        %v767 = vld [vmem:[#allocation2 + $0x5] sm:$0xff]
        %v768 = vld [vmem:[#allocation2 + $0xd] sm:$0xff]
        %v769 = vld [vmem:[#allocation2 + $0x15] sm:$0xff]
        %v770 = vld [vmem:[#allocation2 + $0x1d] sm:$0xff]
        %v771 = vmul.f32 %v767, %v763
        %v772 = vmul.f32 %v768, %v764
        %v773 = vmul.f32 %v769, %v765
        %v774 = vmul.f32 %v770, %v766
        %v775 = vld [vmem:[%s3] sm:$0x1]
        %v776 = vlaneseq
        %v777 = vshrl.u32 %v776, 7
        %v778 = vsub.s32 0, %v777
        %v779 = vrot.slane %v775, %v778
        %v780 = vmul.f32 %v771, %v779
        %v781 = vmul.f32 %v772, %v779
        %v782 = vmul.f32 %v773, %v779
        %v783 = vmul.f32 %v774, %v779
        %v784 = vadd.f32 %v735, %v780
        %v785 = vadd.f32 %v736, %v781
        %v786 = vadd.f32 %v737, %v782
        %v787 = vadd.f32 %v738, %v783
        %v788 = vld [vmem:[%s4] sm:$0x1]
        %v790 = vlaneseq
        %v791 = vshrl.u32 %v790, 7
        %v792 = vsub.s32 0, %v791
        %v793 = vrot.slane %v788, %v792
        %v795 = vadd.f32 %v784, %v793
        %v796 = vadd.f32 %v785, %v793
        %v797 = vadd.f32 %v786, %v793
        %v798 = vadd.f32 %v787, %v793
        %799 = vst [vmem:[#allocation2] sm:$0xff] %v613
        %800 = vst.msk [vmem:[#allocation3] sm:$0xff] %vm655, %v488
        %v801 = vpack.c.bf16 %v796, %v795
        %v802 = vpack.c.bf16 %v798, %v797
        %v803 = vld [vmem:[%s5] sm:$0xf]
        %v804 = vld [vmem:[%s5 + $0x4] sm:$0xf]
        %v805 = vld [vmem:[%s5 + $0x8] sm:$0xf]
        %v806 = vld [vmem:[%s5 + $0xc] sm:$0xf]
        %v811 = vunpack.c.l.b16 %v803
        %v812 = vunpack.c.l.b16 %v804
        %v813 = vunpack.c.l.b16 %v805
        %v814 = vunpack.c.l.b16 %v806
        %v815 = vpack.c.b16 %v812, %v811
        %v816 = vpack.c.b16 %v814, %v813
        %v820 = vsel %vm555, %v801, 0
        %v823 = vsel %vm555, %v802, 0
        %825 = vmatprep.subr.bf16.mxu0 0
        %826 = vmatpush1.bf16.msra.mxu0 %v815
        %827 = vmatprep.subr.bf16.mxu0 0
        %828 = vmatpush1.bf16.msra.mxu0 %v816
        %829 = vmatprep.subr.bf16.mxu0 0
        %830 = vmatpush1.bf16.msra.mxu0 0
        %831 = vmatprep.subr.bf16.mxu0 0
        %832 = vmatpush1.bf16.msra.mxu0 0
        %833 = vmatprep.subr.bf16.mxu0 0
        %834 = vmatpush1.bf16.msra.mxu0 0
        %835 = vmatprep.subr.bf16.mxu0 0
        %836 = vmatpush1.bf16.msra.mxu0 0
        %837 = vmatprep.subr.bf16.mxu0 0
        %838 = vmatpush1.bf16.msra.mxu0 0
        %839 = vmatprep.subr.bf16.mxu0 0
        %840 = vmatpush1.bf16.msra.mxu0 0
        %841 = vmatprep.subr.bf16.mxu0 0
        %842 = vmatpush1.bf16.msra.mxu0 0
        %843 = vmatprep.subr.bf16.mxu0 0
        %844 = vmatpush1.bf16.msra.mxu0 0
        %845 = vmatprep.subr.bf16.mxu0 0
        %846 = vmatpush1.bf16.msra.mxu0 0
        %847 = vmatprep.subr.bf16.mxu0 0
        %848 = vmatpush1.bf16.msra.mxu0 0
        %849 = vmatprep.subr.bf16.mxu0 0
        %850 = vmatpush1.bf16.msra.mxu0 0
        %851 = vmatprep.subr.bf16.mxu0 0
        %852 = vmatpush1.bf16.msra.mxu0 0
        %853 = vmatprep.subr.bf16.mxu0 0
        %854 = vmatpush1.bf16.msra.mxu0 0
        %855 = vmatprep.subr.bf16.mxu0 0
        %856 = vmatpush1.bf16.msra.mxu0 0
        %857 = vmatprep.mubr.bf16.mxu0 0
        %858 = vmatmul.mubr.bf16.gmra.mrb[0].mxu0 %v820
        %v859 = vpop.f32.mrb[0].mxu0
        %v860 = vadd.f32 0.0, %v859
        %v861 = vpop.f32.mrb[0].mxu0
        %v862 = vpop.f32.mrb[0].mxu0
        %v863 = vadd.f32 0.0, %v862
        %v864 = vpop.f32.mrb[0].mxu0
        %865 = vmatprep.mubr.bf16.mxu0 0
        %866 = vmatmul.mubr.bf16.gmra.mrb[0].mxu0 %v823
        %v867 = vpop.f32.mrb[0].mxu0
        %v868 = vadd.f32 0.0, %v867
        %v869 = vpop.f32.mrb[0].mxu0
        %v870 = vpop.f32.mrb[0].mxu0
        %v871 = vadd.f32 0.0, %v870
        %v872 = vpop.f32.mrb[0].mxu0
        %873 = vdwg.mxu0
        %874 = vst.msk [vmem:[#allocation5] sm:$0xff] %vm555, %v860
        %875 = vst.msk [vmem:[#allocation5 + $0x10] sm:$0xff] %vm555, %v863
        %876 = vst.msk [vmem:[#allocation5 + $0x20] sm:$0xff] %vm555, %v868
        %877 = vst.msk [vmem:[#allocation5 + $0x30] sm:$0xff] %vm555, %v871
        %882 = vrot.lane.b32.xlu0 %v860, 96
        %v883 = vpop.permute.xlu0 %882
        %884 = vrot.lane.b32.xlu0 %v863, 96
        %v885 = vpop.permute.xlu0 %884
        %886 = vrot.lane.b32.xlu0 %v868, 96
        %v887 = vpop.permute.xlu0 %886
        %888 = vrot.lane.b32.xlu0 %v871, 96
        %v889 = vpop.permute.xlu0 %888
        %894 = vst.msk [vmem:[#allocation5 + $0x8] sm:$0xff] %vm555, %v883
        %895 = vst.msk [vmem:[#allocation5 + $0x18] sm:$0xff] %vm555, %v885
        %896 = vst.msk [vmem:[#allocation5 + $0x28] sm:$0xff] %vm555, %v887
        %897 = vst.msk [vmem:[#allocation5 + $0x38] sm:$0xff] %vm555, %v889
        %s898 = scalar_lea.vmem %s5, 16
        %v899 = vld [vmem:[%s898] sm:$0xf]
        %v900 = vld [vmem:[%s898 + $0x4] sm:$0xf]
        %v901 = vld [vmem:[%s898 + $0x8] sm:$0xf]
        %v902 = vld [vmem:[%s898 + $0xc] sm:$0xf]
        %905 = vrot.lane.b32.xlu0 %v801, 96
        %v906 = vpop.permute.xlu0 %905
        %907 = vrot.lane.b32.xlu0 %v802, 96
        %v908 = vpop.permute.xlu0 %907
        %v913 = vunpack.c.l.b16 %v899
        %v914 = vunpack.c.l.b16 %v900
        %v915 = vunpack.c.l.b16 %v901
        %v916 = vunpack.c.l.b16 %v902
        %v917 = vpack.c.b16 %v914, %v913
        %v918 = vpack.c.b16 %v916, %v915
        %v922 = vsel %vm555, %v906, 0
        %v925 = vsel %vm555, %v908, 0
        %927 = vmatprep.subr.bf16.mxu0 0
        %928 = vmatpush1.bf16.msra.mxu0 %v917
        %929 = vmatprep.subr.bf16.mxu0 0
        %930 = vmatpush1.bf16.msra.mxu0 %v918
        %931 = vmatprep.subr.bf16.mxu0 0
        %932 = vmatpush1.bf16.msra.mxu0 0
        %933 = vmatprep.subr.bf16.mxu0 0
        %934 = vmatpush1.bf16.msra.mxu0 0
        %935 = vmatprep.subr.bf16.mxu0 0
        %936 = vmatpush1.bf16.msra.mxu0 0
        %937 = vmatprep.subr.bf16.mxu0 0
        %938 = vmatpush1.bf16.msra.mxu0 0
        %939 = vmatprep.subr.bf16.mxu0 0
        %940 = vmatpush1.bf16.msra.mxu0 0
        %941 = vmatprep.subr.bf16.mxu0 0
        %942 = vmatpush1.bf16.msra.mxu0 0
        %943 = vmatprep.subr.bf16.mxu0 0
        %944 = vmatpush1.bf16.msra.mxu0 0
        %945 = vmatprep.subr.bf16.mxu0 0
        %946 = vmatpush1.bf16.msra.mxu0 0
        %947 = vmatprep.subr.bf16.mxu0 0
        %948 = vmatpush1.bf16.msra.mxu0 0
        %949 = vmatprep.subr.bf16.mxu0 0
        %950 = vmatpush1.bf16.msra.mxu0 0
        %951 = vmatprep.subr.bf16.mxu0 0
        %952 = vmatpush1.bf16.msra.mxu0 0
        %953 = vmatprep.subr.bf16.mxu0 0
        %954 = vmatpush1.bf16.msra.mxu0 0
        %955 = vmatprep.subr.bf16.mxu0 0
        %956 = vmatpush1.bf16.msra.mxu0 0
        %957 = vmatprep.subr.bf16.mxu0 0
        %958 = vmatpush1.bf16.msra.mxu0 0
        %959 = vmatprep.mubr.bf16.mxu0 0
        %960 = vmatmul.mubr.bf16.gmra.mrb[0].mxu0 %v922
        %v961 = vpop.f32.mrb[0].mxu0
        %v962 = vadd.f32 0.0, %v961
        %v963 = vpop.f32.mrb[0].mxu0
        %v964 = vpop.f32.mrb[0].mxu0
        %v965 = vadd.f32 0.0, %v964
        %v966 = vpop.f32.mrb[0].mxu0
        %967 = vmatprep.mubr.bf16.mxu0 0
        %968 = vmatmul.mubr.bf16.gmra.mrb[0].mxu0 %v925
        %v969 = vpop.f32.mrb[0].mxu0
        %v970 = vadd.f32 0.0, %v969
        %v971 = vpop.f32.mrb[0].mxu0
        %v972 = vpop.f32.mrb[0].mxu0
        %v973 = vadd.f32 0.0, %v972
        %v974 = vpop.f32.mrb[0].mxu0
        %975 = vdwg.mxu0
        %980 = vrot.lane.b32.xlu0 %v962, 32
        %v981 = vpop.permute.xlu0 %980
        %982 = vrot.lane.b32.xlu0 %v965, 32
        %v983 = vpop.permute.xlu0 %982
        %984 = vrot.lane.b32.xlu0 %v970, 32
        %v985 = vpop.permute.xlu0 %984
        %986 = vrot.lane.b32.xlu0 %v973, 32
        %v987 = vpop.permute.xlu0 %986
        %vm992 = vcmask 523520
        %993 = vst.msk [vmem:[#allocation5] sm:$0xff] %vm992, %v981
        %994 = vst.msk [vmem:[#allocation5 + $0x10] sm:$0xff] %vm992, %v983
        %995 = vst.msk [vmem:[#allocation5 + $0x20] sm:$0xff] %vm992, %v985
        %996 = vst.msk [vmem:[#allocation5 + $0x30] sm:$0xff] %vm992, %v987
        %997 = vst.msk [vmem:[#allocation5 + $0x8] sm:$0xff] %vm992, %v962
        %998 = vst.msk [vmem:[#allocation5 + $0x18] sm:$0xff] %vm992, %v965
        %999 = vst.msk [vmem:[#allocation5 + $0x28] sm:$0xff] %vm992, %v970
        %1000 = vst.msk [vmem:[#allocation5 + $0x38] sm:$0xff] %vm992, %v973
        %s1001 = scalar_lea.vmem %s5, 32
        %v1002 = vld [vmem:[%s1001] sm:$0xf]
        %v1003 = vld [vmem:[%s1001 + $0x4] sm:$0xf]
        %v1004 = vld [vmem:[%s1001 + $0x8] sm:$0xf]
        %v1005 = vld [vmem:[%s1001 + $0xc] sm:$0xf]
        %1006 = vrot.lane.b32.xlu0 %v801, 64
        %v1007 = vpop.permute.xlu0 %1006
        %1008 = vrot.lane.b32.xlu0 %v802, 64
        %v1009 = vpop.permute.xlu0 %1008
        %v1014 = vunpack.c.l.b16 %v1002
        %v1015 = vunpack.c.l.b16 %v1003
        %v1016 = vunpack.c.l.b16 %v1004
        %v1017 = vunpack.c.l.b16 %v1005
        %v1018 = vpack.c.b16 %v1015, %v1014
        %v1019 = vpack.c.b16 %v1017, %v1016
        %v1023 = vsel %vm555, %v1007, 0
        %v1026 = vsel %vm555, %v1009, 0
        %1028 = vmatprep.subr.bf16.mxu0 0
        %1029 = vmatpush1.bf16.msra.mxu0 %v1018
        %1030 = vmatprep.subr.bf16.mxu0 0
        %1031 = vmatpush1.bf16.msra.mxu0 %v1019
        %1032 = vmatprep.subr.bf16.mxu0 0
        %1033 = vmatpush1.bf16.msra.mxu0 0
        %1034 = vmatprep.subr.bf16.mxu0 0
        %1035 = vmatpush1.bf16.msra.mxu0 0
        %1036 = vmatprep.subr.bf16.mxu0 0
        %1037 = vmatpush1.bf16.msra.mxu0 0
        %1038 = vmatprep.subr.bf16.mxu0 0
        %1039 = vmatpush1.bf16.msra.mxu0 0
        %1040 = vmatprep.subr.bf16.mxu0 0
        %1041 = vmatpush1.bf16.msra.mxu0 0
        %1042 = vmatprep.subr.bf16.mxu0 0
        %1043 = vmatpush1.bf16.msra.mxu0 0
        %1044 = vmatprep.subr.bf16.mxu0 0
        %1045 = vmatpush1.bf16.msra.mxu0 0
        %1046 = vmatprep.subr.bf16.mxu0 0
        %1047 = vmatpush1.bf16.msra.mxu0 0
        %1048 = vmatprep.subr.bf16.mxu0 0
        %1049 = vmatpush1.bf16.msra.mxu0 0
        %1050 = vmatprep.subr.bf16.mxu0 0
        %1051 = vmatpush1.bf16.msra.mxu0 0
        %1052 = vmatprep.subr.bf16.mxu0 0
        %1053 = vmatpush1.bf16.msra.mxu0 0
        %1054 = vmatprep.subr.bf16.mxu0 0
        %1055 = vmatpush1.bf16.msra.mxu0 0
        %1056 = vmatprep.subr.bf16.mxu0 0
        %1057 = vmatpush1.bf16.msra.mxu0 0
        %1058 = vmatprep.subr.bf16.mxu0 0
        %1059 = vmatpush1.bf16.msra.mxu0 0
        %1060 = vmatprep.mubr.bf16.mxu0 0
        %1061 = vmatmul.mubr.bf16.gmra.mrb[0].mxu0 %v1023
        %v1062 = vpop.f32.mrb[0].mxu0
        %v1063 = vadd.f32 0.0, %v1062
        %v1064 = vpop.f32.mrb[0].mxu0
        %v1065 = vpop.f32.mrb[0].mxu0
        %v1066 = vadd.f32 0.0, %v1065
        %v1067 = vpop.f32.mrb[0].mxu0
        %1068 = vmatprep.mubr.bf16.mxu0 0
        %1069 = vmatmul.mubr.bf16.gmra.mrb[0].mxu0 %v1026
        %v1070 = vpop.f32.mrb[0].mxu0
        %v1071 = vadd.f32 0.0, %v1070
        %v1072 = vpop.f32.mrb[0].mxu0
        %v1073 = vpop.f32.mrb[0].mxu0
        %v1074 = vadd.f32 0.0, %v1073
        %v1075 = vpop.f32.mrb[0].mxu0
        %1076 = vdwg.mxu0
        %1081 = vrot.lane.b32.xlu0 %v1063, 64
        %v1082 = vpop.permute.xlu0 %1081
        %1083 = vrot.lane.b32.xlu0 %v1066, 64
        %v1084 = vpop.permute.xlu0 %1083
        %1085 = vrot.lane.b32.xlu0 %v1071, 64
        %v1086 = vpop.permute.xlu0 %1085
        %1087 = vrot.lane.b32.xlu0 %v1074, 64
        %v1088 = vpop.permute.xlu0 %1087
        %vm1093 = vcmask 785920
        %1094 = vst.msk [vmem:[#allocation5] sm:$0xff] %vm1093, %v1082
        %1095 = vst.msk [vmem:[#allocation5 + $0x10] sm:$0xff] %vm1093, %v1084
        %1096 = vst.msk [vmem:[#allocation5 + $0x20] sm:$0xff] %vm1093, %v1086
        %1097 = vst.msk [vmem:[#allocation5 + $0x30] sm:$0xff] %vm1093, %v1088
        %1098 = vrot.lane.b32.xlu0 %v1063, 32
        %v1099 = vpop.permute.xlu0 %1098
        %1100 = vrot.lane.b32.xlu0 %v1066, 32
        %v1101 = vpop.permute.xlu0 %1100
        %1102 = vrot.lane.b32.xlu0 %v1071, 32
        %v1103 = vpop.permute.xlu0 %1102
        %1104 = vrot.lane.b32.xlu0 %v1074, 32
        %v1105 = vpop.permute.xlu0 %1104
        %1110 = vst.msk [vmem:[#allocation5 + $0x8] sm:$0xff] %vm1093, %v1099
        %1111 = vst.msk [vmem:[#allocation5 + $0x18] sm:$0xff] %vm1093, %v1101
        %1112 = vst.msk [vmem:[#allocation5 + $0x28] sm:$0xff] %vm1093, %v1103
        %1113 = vst.msk [vmem:[#allocation5 + $0x38] sm:$0xff] %vm1093, %v1105
        %s1114 = scalar_lea.vmem %s5, 48
        %v1115 = vld [vmem:[%s1114] sm:$0xf]
        %v1116 = vld [vmem:[%s1114 + $0x4] sm:$0xf]
        %v1117 = vld [vmem:[%s1114 + $0x8] sm:$0xf]
        %v1118 = vld [vmem:[%s1114 + $0xc] sm:$0xf]
        %1119 = vrot.lane.b32.xlu0 %v801, 32
        %v1120 = vpop.permute.xlu0 %1119
        %1121 = vrot.lane.b32.xlu0 %v802, 32
        %v1122 = vpop.permute.xlu0 %1121
        %v1127 = vunpack.c.l.b16 %v1115
        %v1128 = vunpack.c.l.b16 %v1116
        %v1129 = vunpack.c.l.b16 %v1117
        %v1130 = vunpack.c.l.b16 %v1118
        %v1131 = vpack.c.b16 %v1128, %v1127
        %v1132 = vpack.c.b16 %v1130, %v1129
        %v1136 = vsel %vm555, %v1120, 0
        %v1139 = vsel %vm555, %v1122, 0
        %1141 = vmatprep.subr.bf16.mxu0 0
        %1142 = vmatpush1.bf16.msra.mxu0 %v1131
        %1143 = vmatprep.subr.bf16.mxu0 0
        %1144 = vmatpush1.bf16.msra.mxu0 %v1132
        %1145 = vmatprep.subr.bf16.mxu0 0
        %1146 = vmatpush1.bf16.msra.mxu0 0
        %1147 = vmatprep.subr.bf16.mxu0 0
        %1148 = vmatpush1.bf16.msra.mxu0 0
        %1149 = vmatprep.subr.bf16.mxu0 0
        %1150 = vmatpush1.bf16.msra.mxu0 0
        %1151 = vmatprep.subr.bf16.mxu0 0
        %1152 = vmatpush1.bf16.msra.mxu0 0
        %1153 = vmatprep.subr.bf16.mxu0 0
        %1154 = vmatpush1.bf16.msra.mxu0 0
        %1155 = vmatprep.subr.bf16.mxu0 0
        %1156 = vmatpush1.bf16.msra.mxu0 0
        %1157 = vmatprep.subr.bf16.mxu0 0
        %1158 = vmatpush1.bf16.msra.mxu0 0
        %1159 = vmatprep.subr.bf16.mxu0 0
        %1160 = vmatpush1.bf16.msra.mxu0 0
        %1161 = vmatprep.subr.bf16.mxu0 0
        %1162 = vmatpush1.bf16.msra.mxu0 0
        %1163 = vmatprep.subr.bf16.mxu0 0
        %1164 = vmatpush1.bf16.msra.mxu0 0
        %1165 = vmatprep.subr.bf16.mxu0 0
        %1166 = vmatpush1.bf16.msra.mxu0 0
        %1167 = vmatprep.subr.bf16.mxu0 0
        %1168 = vmatpush1.bf16.msra.mxu0 0
        %1169 = vmatprep.subr.bf16.mxu0 0
        %1170 = vmatpush1.bf16.msra.mxu0 0
        %1171 = vmatprep.subr.bf16.mxu0 0
        %1172 = vmatpush1.bf16.msra.mxu0 0
        %1173 = vmatprep.mubr.bf16.mxu0 0
        %1174 = vmatmul.mubr.bf16.gmra.mrb[0].mxu0 %v1136
        %v1175 = vpop.f32.mrb[0].mxu0
        %v1176 = vadd.f32 0.0, %v1175
        %v1177 = vpop.f32.mrb[0].mxu0
        %v1178 = vpop.f32.mrb[0].mxu0
        %v1179 = vadd.f32 0.0, %v1178
        %v1180 = vpop.f32.mrb[0].mxu0
        %1181 = vmatprep.mubr.bf16.mxu0 0
        %1182 = vmatmul.mubr.bf16.gmra.mrb[0].mxu0 %v1139
        %v1183 = vpop.f32.mrb[0].mxu0
        %v1184 = vadd.f32 0.0, %v1183
        %v1185 = vpop.f32.mrb[0].mxu0
        %v1186 = vpop.f32.mrb[0].mxu0
        %v1187 = vadd.f32 0.0, %v1186
        %v1188 = vpop.f32.mrb[0].mxu0
        %1189 = vdwg.mxu0
        %1194 = vrot.lane.b32.xlu0 %v1176, 96
        %v1195 = vpop.permute.xlu0 %1194
        %1196 = vrot.lane.b32.xlu0 %v1179, 96
        %v1197 = vpop.permute.xlu0 %1196
        %1198 = vrot.lane.b32.xlu0 %v1184, 96
        %v1199 = vpop.permute.xlu0 %1198
        %1200 = vrot.lane.b32.xlu0 %v1187, 96
        %v1201 = vpop.permute.xlu0 %1200
        %vm1206 = vcmask 1048320
        %1207 = vst.msk [vmem:[#allocation5] sm:$0xff] %vm1206, %v1195
        %1208 = vst.msk [vmem:[#allocation5 + $0x10] sm:$0xff] %vm1206, %v1197
        %1209 = vst.msk [vmem:[#allocation5 + $0x20] sm:$0xff] %vm1206, %v1199
        %1210 = vst.msk [vmem:[#allocation5 + $0x30] sm:$0xff] %vm1206, %v1201
        %1211 = vrot.lane.b32.xlu0 %v1176, 64
        %v1212 = vpop.permute.xlu0 %1211
        %1213 = vrot.lane.b32.xlu0 %v1179, 64
        %v1214 = vpop.permute.xlu0 %1213
        %1215 = vrot.lane.b32.xlu0 %v1184, 64
        %v1216 = vpop.permute.xlu0 %1215
        %1217 = vrot.lane.b32.xlu0 %v1187, 64
        %v1218 = vpop.permute.xlu0 %1217
        %1223 = vst.msk [vmem:[#allocation5 + $0x8] sm:$0xff] %vm1206, %v1212
        %1224 = vst.msk [vmem:[#allocation5 + $0x18] sm:$0xff] %vm1206, %v1214
        %1225 = vst.msk [vmem:[#allocation5 + $0x28] sm:$0xff] %vm1206, %v1216
        %1226 = vst.msk [vmem:[#allocation5 + $0x38] sm:$0xff] %vm1206, %v1218
        %v1227 = vld [vmem:[#allocation5] sm:$0xff]
        %v1228 = vld [vmem:[#allocation5 + $0x8] sm:$0xff]
        %v1229 = vld [vmem:[#allocation5 + $0x10] sm:$0xff]
        %v1230 = vld [vmem:[#allocation5 + $0x18] sm:$0xff]
        %v1231 = vld [vmem:[#allocation5 + $0x20] sm:$0xff]
        %v1232 = vld [vmem:[#allocation5 + $0x28] sm:$0xff]
        %v1233 = vld [vmem:[#allocation5 + $0x30] sm:$0xff]
        %v1234 = vld [vmem:[#allocation5 + $0x38] sm:$0xff]
        %v1235 = vld [vmem:[%s6] sm:$0x3]
        %v1237 = vlaneseq
        %v1238 = vshrl.u32 %v1237, 7
        %v1239 = vsub.s32 0, %v1238
        %v1240 = vrot.slane %v1235, %v1239
        %v1241 = vlaneseq
        %v1242 = vshrl.u32 %v1241, 7
        %v1243 = vsub.s32 1, %v1242
        %v1244 = vrot.slane %v1235, %v1243
        %v1247 = vadd.f32 %v1227, %v1240
        %v1248 = vadd.f32 %v1228, %v1244
        %v1249 = vadd.f32 %v1229, %v1240
        %v1250 = vadd.f32 %v1230, %v1244
        %v1251 = vadd.f32 %v1231, %v1240
        %v1252 = vadd.f32 %v1232, %v1244
        %v1253 = vadd.f32 %v1233, %v1240
        %v1254 = vadd.f32 %v1234, %v1244
        %v1255 = vsub.f32 0.0, %v1247
        %v1256 = vsub.f32 0.0, %v1249
        %v1257 = vsub.f32 0.0, %v1251
        %v1258 = vsub.f32 0.0, %v1253
        %v1259 = vmul.f32 %v1255, 1.442695
        %v1260 = vpow.pop %v1259
        %v1261 = vmul.f32 %v1256, 1.442695
        %v1262 = vpow.pop %v1261
        %v1263 = vmul.f32 %v1257, 1.442695
        %v1264 = vpow.pop %v1263
        %v1265 = vmul.f32 %v1258, 1.442695
        %v1266 = vpow.pop %v1265
        %v1267 = vadd.f32 %v1260, 1.0
        %v1268 = vadd.f32 %v1262, 1.0
        %v1269 = vadd.f32 %v1264, 1.0
        %v1270 = vadd.f32 %v1266, 1.0
        %v1271 = vrcp.pop %v1267
        %v1272 = vrcp.pop %v1268
        %v1273 = vrcp.pop %v1269
        %v1274 = vrcp.pop %v1270
        %v1275 = vsub.f32 0.0, %v1248
        %v1276 = vsub.f32 0.0, %v1250
        %v1277 = vsub.f32 0.0, %v1252
        %v1278 = vsub.f32 0.0, %v1254
        %v1279 = vmul.f32 %v1275, 1.442695
        %v1280 = vpow.pop %v1279
        %v1281 = vmul.f32 %v1276, 1.442695
        %v1282 = vpow.pop %v1281
        %v1283 = vmul.f32 %v1277, 1.442695
        %v1284 = vpow.pop %v1283
        %v1285 = vmul.f32 %v1278, 1.442695
        %v1286 = vpow.pop %v1285
        %v1287 = vadd.f32 %v1280, 1.0
        %v1288 = vadd.f32 %v1282, 1.0
        %v1289 = vadd.f32 %v1284, 1.0
        %v1290 = vadd.f32 %v1286, 1.0
        %v1291 = vrcp.pop %v1287
        %v1292 = vmul.f32 1.0, %v1291
        %v1293 = vrcp.pop %v1288
        %v1294 = vmul.f32 1.0, %v1293
        %v1295 = vrcp.pop %v1289
        %v1296 = vmul.f32 1.0, %v1295
        %v1297 = vrcp.pop %v1290
        %v1298 = vmul.f32 1.0, %v1297
        %v1299 = vld [vmem:[%s7] sm:$0x1]
        %v1301 = vlaneseq
        %v1302 = vshrl.u32 %v1301, 7
        %v1303 = vsub.s32 0, %v1302
        %v1304 = vrot.slane %v1299, %v1303
        %v1306 = vmul.f32 %v1292, %v1304
        %v1307 = vmul.f32 %v1294, %v1304
        %v1308 = vmul.f32 %v1296, %v1304
        %v1309 = vmul.f32 %v1298, %v1304
        %v1310 = vmul.f32 %v1306, 1.442695
        %v1311 = vpow.pop %v1310
        %v1312 = vmul.f32 %v1307, 1.442695
        %v1313 = vpow.pop %v1312
        %v1314 = vmul.f32 %v1308, 1.442695
        %v1315 = vpow.pop %v1314
        %v1316 = vmul.f32 %v1309, 1.442695
        %v1317 = vpow.pop %v1316
        %v1318 = vmul.f32 %v1311, %v1311
        %v1319 = vmul.f32 %v1313, %v1313
        %v1320 = vmul.f32 %v1315, %v1315
        %v1321 = vmul.f32 %v1317, %v1317
        %v1322 = vsub.f32 1.0, %v1318
        %v1323 = vsub.f32 1.0, %v1319
        %v1324 = vsub.f32 1.0, %v1320
        %v1325 = vsub.f32 1.0, %v1321
        %v1326 = vmax.f32 %v1322, 0.0
        %v1327 = vmax.f32 %v1323, 0.0
        %v1328 = vmax.f32 %v1324, 0.0
        %v1329 = vmax.f32 %v1325, 0.0
        %v1330 = vrsqrt.pop %v1326
        %v1331 = vmul.f32 %v1326, %v1330
        %vm1332 = vcmp.eq.f32.partialorder %v1326, inf
        %v1333 = vsel %vm1332, %v1326, %v1331
        %vm1334 = vcmp.eq.f32.partialorder %v1326, 0.0
        %v1335 = vand.u32 %v1326, 2147483648
        %v1336 = vsel %vm1334, %v1335, %v1333
        %v1337 = vrsqrt.pop %v1327
        %v1338 = vmul.f32 %v1327, %v1337
        %vm1339 = vcmp.eq.f32.partialorder %v1327, inf
        %v1340 = vsel %vm1339, %v1327, %v1338
        %vm1341 = vcmp.eq.f32.partialorder %v1327, 0.0
        %v1342 = vand.u32 %v1327, 2147483648
        %v1343 = vsel %vm1341, %v1342, %v1340
        %v1344 = vrsqrt.pop %v1328
        %v1345 = vmul.f32 %v1328, %v1344
        %vm1346 = vcmp.eq.f32.partialorder %v1328, inf
        %v1347 = vsel %vm1346, %v1328, %v1345
        %vm1348 = vcmp.eq.f32.partialorder %v1328, 0.0
        %v1349 = vand.u32 %v1328, 2147483648
        %v1350 = vsel %vm1348, %v1349, %v1347
        %v1351 = vrsqrt.pop %v1329
        %v1352 = vmul.f32 %v1329, %v1351
        %vm1353 = vcmp.eq.f32.partialorder %v1329, inf
        %v1354 = vsel %vm1353, %v1329, %v1352
        %vm1355 = vcmp.eq.f32.partialorder %v1329, 0.0
        %v1356 = vand.u32 %v1329, 2147483648
        %v1357 = vsel %vm1355, %v1356, %v1354
        %v1358 = vsub.f32 1.0, %v492
        %v1359 = vsub.f32 1.0, %v497
        %v1360 = vsub.f32 1.0, %v502
        %v1361 = vsub.f32 1.0, %v507
        %v1362 = vmul.f32 %v492, %v1336
        %v1363 = vmul.f32 %v497, %v1343
        %v1364 = vmul.f32 %v502, %v1350
        %v1365 = vmul.f32 %v507, %v1357
        %v1366 = vadd.f32 %v1358, %v1362
        %v1367 = vadd.f32 %v1359, %v1363
        %v1368 = vadd.f32 %v1360, %v1364
        %v1369 = vadd.f32 %v1361, %v1365
        %v1370 = vmul.f32 %v795, %v1271
        %v1371 = vmul.f32 %v796, %v1272
        %v1372 = vmul.f32 %v797, %v1273
        %v1373 = vmul.f32 %v798, %v1274
        %v1374 = vmul.f32 %v1370, %v1366
        %v1375 = vmul.f32 %v1371, %v1367
        %v1376 = vmul.f32 %v1372, %v1368
        %v1377 = vmul.f32 %v1373, %v1369
        %v1378 = vmul.f32 %v1311, %v492
        %v1379 = vmul.f32 %v1313, %v497
        %v1380 = vmul.f32 %v1315, %v502
        %v1381 = vmul.f32 %v1317, %v507
        %vm1386 = vcmask 1040384
        %v1387 = vrot.slane %v1378, 7
        %v1388 = vrot.slane %v1379, 7
        %v1389 = vsel %vm1386, %v1387, %v1388
        %v1390 = vrot.slane %v1380, 7
        %v1391 = vsel %vm1386, %v1388, %v1390
        %v1392 = vrot.slane %v1381, 7
        %v1393 = vsel %vm1386, %v1390, %v1392
        %v1398 = vsel %vm1386, 1.0, %v1387
        %v1403 = vrot.slane %v1374, 7
        %v1404 = vrot.slane %v1375, 7
        %v1405 = vsel %vm1386, %v1403, %v1404
        %v1406 = vrot.slane %v1376, 7
        %v1407 = vsel %vm1386, %v1404, %v1406
        %v1408 = vrot.slane %v1377, 7
        %v1409 = vsel %vm1386, %v1406, %v1408
        %v1414 = vsel %vm1386, 0.0, %v1403
        %v1415 = vmul.f32 %v1378, %v1414
        %v1416 = vmul.f32 %v1379, %v1405
        %v1417 = vmul.f32 %v1380, %v1407
        %v1418 = vmul.f32 %v1381, %v1409
        %v1419 = vadd.f32 %v1415, %v1374
        %v1420 = vadd.f32 %v1416, %v1375
        %v1421 = vadd.f32 %v1417, %v1376
        %v1422 = vadd.f32 %v1418, %v1377
        %v1423 = vmul.f32 %v1378, %v1398
        %v1424 = vmul.f32 %v1379, %v1389
        %v1425 = vmul.f32 %v1380, %v1391
        %v1426 = vmul.f32 %v1381, %v1393
        %vm1431 = vcmask 1041408
        %v1432 = vrot.slane %v1423, 6
        %v1433 = vrot.slane %v1424, 6
        %v1434 = vsel %vm1431, %v1432, %v1433
        %v1435 = vrot.slane %v1425, 6
        %v1436 = vsel %vm1431, %v1433, %v1435
        %v1437 = vrot.slane %v1426, 6
        %v1438 = vsel %vm1431, %v1435, %v1437
        %v1443 = vsel %vm1431, 1.0, %v1432
        %v1448 = vrot.slane %v1419, 6
        %v1449 = vrot.slane %v1420, 6
        %v1450 = vsel %vm1431, %v1448, %v1449
        %v1451 = vrot.slane %v1421, 6
        %v1452 = vsel %vm1431, %v1449, %v1451
        %v1453 = vrot.slane %v1422, 6
        %v1454 = vsel %vm1431, %v1451, %v1453
        %v1459 = vsel %vm1431, 0.0, %v1448
        %v1460 = vmul.f32 %v1423, %v1459
        %v1461 = vmul.f32 %v1424, %v1450
        %v1462 = vmul.f32 %v1425, %v1452
        %v1463 = vmul.f32 %v1426, %v1454
        %v1464 = vadd.f32 %v1460, %v1419
        %v1465 = vadd.f32 %v1461, %v1420
        %v1466 = vadd.f32 %v1462, %v1421
        %v1467 = vadd.f32 %v1463, %v1422
        %v1468 = vmul.f32 %v1423, %v1443
        %v1469 = vmul.f32 %v1424, %v1434
        %v1470 = vmul.f32 %v1425, %v1436
        %v1471 = vmul.f32 %v1426, %v1438
        %vm1476 = vcmask 1043456
        %v1477 = vrot.slane %v1468, 4
        %v1478 = vrot.slane %v1469, 4
        %v1479 = vsel %vm1476, %v1477, %v1478
        %v1480 = vrot.slane %v1470, 4
        %v1481 = vsel %vm1476, %v1478, %v1480
        %v1482 = vrot.slane %v1471, 4
        %v1483 = vsel %vm1476, %v1480, %v1482
        %v1488 = vsel %vm1476, 1.0, %v1477
        %v1493 = vrot.slane %v1464, 4
        %v1494 = vrot.slane %v1465, 4
        %v1495 = vsel %vm1476, %v1493, %v1494
        %v1496 = vrot.slane %v1466, 4
        %v1497 = vsel %vm1476, %v1494, %v1496
        %v1498 = vrot.slane %v1467, 4
        %v1499 = vsel %vm1476, %v1496, %v1498
        %v1504 = vsel %vm1476, 0.0, %v1493
        %v1505 = vmul.f32 %v1468, %v1504
        %v1506 = vmul.f32 %v1469, %v1495
        %v1507 = vmul.f32 %v1470, %v1497
        %v1508 = vmul.f32 %v1471, %v1499
        %v1509 = vadd.f32 %v1505, %v1464
        %v1510 = vadd.f32 %v1506, %v1465
        %v1511 = vadd.f32 %v1507, %v1466
        %v1512 = vadd.f32 %v1508, %v1467
        %v1513 = vmul.f32 %v1468, %v1488
        %v1514 = vmul.f32 %v1469, %v1479
        %v1515 = vmul.f32 %v1470, %v1481
        %v1516 = vmul.f32 %v1471, %v1483
        %v1517 = vmul.f32 %v1513, 0.0
        %v1518 = vmul.f32 %v1514, %v1509
        %v1519 = vmul.f32 %v1515, %v1510
        %v1520 = vmul.f32 %v1516, %v1511
        %v1521 = vadd.f32 %v1517, %v1509
        %v1522 = vadd.f32 %v1518, %v1510
        %v1523 = vadd.f32 %v1519, %v1511
        %v1524 = vadd.f32 %v1520, %v1512
        %v1525 = vmul.f32 %v1514, %v1513
        %v1526 = vmul.f32 %v1515, %v1514
        %v1527 = vmul.f32 %v1516, %v1515
        %v1528 = vmul.f32 %v1525, 0.0
        %v1529 = vmul.f32 %v1526, %v1521
        %v1530 = vmul.f32 %v1527, %v1522
        %v1531 = vadd.f32 %v1517, %v1521
        %v1532 = vadd.f32 %v1528, %v1522
        %v1533 = vadd.f32 %v1529, %v1523
        %v1534 = vadd.f32 %v1530, %v1524
        %v1535 = vmul.f32 %v1526, %v1513
        %v1536 = vmul.f32 %v1527, %v1525
        %v1537 = vld [vmem:[#allocation4] sm:$0x1]
        %v1539 = vlaneseq
        %v1540 = vshrl.u32 %v1539, 7
        %v1541 = vsub.s32 0, %v1540
        %v1542 = vrot.slane %v1537, %v1541
        %v1544 = vmul.f32 %v1513, %v1542
        %v1545 = vmul.f32 %v1525, %v1542
        %v1546 = vmul.f32 %v1535, %v1542
        %v1547 = vmul.f32 %v1536, %v1542
        %v1548 = vadd.f32 %v1531, %v1544
        %v1549 = vadd.f32 %v1532, %v1545
        %v1550 = vadd.f32 %v1533, %v1546
        %v1551 = vadd.f32 %v1534, %v1547
        %1552 = vst [vmem:[#allocation4 - $0x7] sm:$0x80] %v1551
        %v1553 = vmul.f32 %v1548, %v647
        %v1554 = vmul.f32 %v1549, %v648
        %v1555 = vmul.f32 %v1550, %v649
        %v1556 = vmul.f32 %v1551, %v650
        %v1557 = vpack.c.bf16 %v1554, %v1553
        %v1558 = vpack.c.bf16 %v1556, %v1555
        %v1561 = vunpack.c.l.b16 %v1557
        %v1562 = vunpack.c.h.b16 %v1557
        %v1563 = vunpack.c.l.b16 %v1558
        %v1564 = vunpack.c.h.b16 %v1558
        %v1565 = vpack.c.b16 %v1561, %v1561
        %v1566 = vpack.c.b16 %v1562, %v1562
        %v1567 = vpack.c.b16 %v1563, %v1563
        %v1568 = vpack.c.b16 %v1564, %v1564
        %1573 = vst [vmem:[%s434] sm:$0xf] %v1565
        %1574 = vst [vmem:[%s434 + $0x4] sm:$0xf] %v1566
        %1575 = vst [vmem:[%s434 + $0x8] sm:$0xf] %v1567
        %1576 = vst [vmem:[%s434 + $0xc] sm:$0xf] %v1568
        %p1577 = scmp.eq.s32.totalorder %s34, 1
        // Predicated region
        $region61: #{recurrent_block_forward.1} parent=55 // pred_check
          %p1578 = pneg %p1577
        $region62: #{recurrent_block_forward.1} parent=55 // pred_check_branch
          %1580 = sbr.rel (%p1578) target = $region64
        $region63: #{recurrent_block_forward.1} parent=55 // pred_region
          %1581 = vst [vmem:[%s471 - $0x5] sm:$0xe0] %v613
          %1582 = vst [vmem:[%s446 - $0x7] sm:$0x80] %v1551
        $region64: #{recurrent_block_forward.1} parent=55 // pred_fallthru
          _
        %s1583 = sand.u32 %s254, 1
        %s1584 = scalar_lea.sflag [#allocation7], %s1583
        %s1585 = sand.u32 %s254, 1
        %s1586 = smul.addr %s1585, 16
        %s1587 = scalar_lea.vmem [#allocation6], %s1586
        %p1588 = scmp.lt.s32.totalorder %s33, 1
        %s1589 = scalar_select %p1588, %s33, 1
        %s1590 = smul.addr %s1589, 4
        %s1591 = scalar_lea.vmem %s10, %s1590
        %s1592 = sand.u32 %s306, 1
        %s1593 = scalar_lea.sflag [#allocation9], %s1592
        %s1594 = sand.u32 %s306, 1
        %s1595 = scalar_lea.vmem [#allocation8], %s1594
        // Predicated region
        $region65: #{recurrent_block_forward.1} parent=55 // pred_check
          %p1596 = pneg %p264
        $region66: #{recurrent_block_forward.1} parent=55 // pred_check_branch
          %1598 = sbr.rel (%p1596) target = $region68
        $region67: #{recurrent_block_forward.1} parent=55 // pred_region
          %s1599 = smul.u32 4, %s34
          %s1601 = ssub.s32 256, 256
          %1602 = vsyncadd %s1584, %s1601
          %s1603 = smul.addr %s33, 8
          %s1604 = sadd.s32 %s1599, %s1603
          %s1605 = smul.addr %s1604, 64
          %s1606 = scalar_lea.hbm %s9, %s1605
          %s1607 = sshll.u32 %s1587, 4
          %s1608 = int_to_ptr.vmem [resolvable:$true] %s1607
          %1613 = dma.vmem_to_hbm [thread:$0]  %s1608, 256, %s1606, %s1584, 64, 64, 4
        $region68: #{recurrent_block_forward.1} parent=55 // pred_fallthru
          _
        // Predicated region
        $region69: #{recurrent_block_forward.1} parent=55 // pred_check
          %p1614 = pneg %p290
        $region70: #{recurrent_block_forward.1} parent=55 // pred_check_branch
          %1616 = sbr.rel (%p1614) target = $region72
        $region71: #{recurrent_block_forward.1} parent=55 // pred_region
          _
        $region72: #{recurrent_block_forward.1} parent=55 // pred_fallthru
          _
        // Predicated region
        $region73: #{recurrent_block_forward.1} parent=55 // pred_check
          %p1617 = pneg %p316
        $region74: #{recurrent_block_forward.1} parent=55 // pred_check_branch
          %1619 = sbr.rel (%p1617) target = $region76
        $region75: #{recurrent_block_forward.1} parent=55 // pred_region
          %s1621 = ssub.s32 16, 16
          %1622 = vsyncadd %s1593, %s1621
          %s1623 = smul.addr %s33, 16
          %s1624 = scalar_lea.hbm %s11, %s1623
          %s1626 = sshll.u32 %s1595, 4
          %s1627 = int_to_ptr.vmem [resolvable:$true] %s1626
          %1629 = dma.vmem_to_hbm [thread:$0]  %s1627, 16, %s1624, %s1593
        $region76: #{recurrent_block_forward.1} parent=55 // pred_fallthru
          _
      $region56: #{recurrent_block_forward.1} parent=5 // pred_fallthru
        _
      %p1630 = scmp.le.s32.totalorder 2, %s24
      // Predicated region
      $region77: #{recurrent_block_forward.1} parent=5 // pred_check
        %p1631 = pneg %p1630
      $region78: #{recurrent_block_forward.1} parent=5 // pred_check_branch
        %1633 = sbr.rel (%p1631) target = $region80
      $region79: #{recurrent_block_forward.1} parent=5 // pred_region
        %s1634 = ssub.s32 %s24, 2
        // Predicated region
        $region81: #{recurrent_block_forward.1} parent=79 // pred_check
          %p1635 = pneg %p270
        $region82: #{recurrent_block_forward.1} parent=79 // pred_check_branch
          %1637 = sbr.rel (%p1635) target = $region84
        $region83: #{recurrent_block_forward.1} parent=79 // pred_region
          %s1638 = sand.u32 %s255, 1
          %s1639 = scalar_lea.sflag [#allocation7], %s1638
          %s1640 = sand.u32 %s255, 1
          %s1641 = smul.addr %s1640, 16
          %s1642 = scalar_lea.vmem [#allocation6], %s1641
          %1643 = dma.done %s1639, 256
        $region84: #{recurrent_block_forward.1} parent=79 // pred_fallthru
          _
        // Predicated region
        $region85: #{recurrent_block_forward.1} parent=79 // pred_check
          %p1644 = pneg %p296
        $region86: #{recurrent_block_forward.1} parent=79 // pred_check_branch
          %1646 = sbr.rel (%p1644) target = $region88
        $region87: #{recurrent_block_forward.1} parent=79 // pred_region
          %p1647 = scmp.lt.s32.totalorder %s35, 1
          %s1648 = scalar_select %p1647, %s35, 1
          %s1649 = smul.addr %s1648, 4
          %s1650 = scalar_lea.vmem %s10, %s1649
        $region88: #{recurrent_block_forward.1} parent=79 // pred_fallthru
          _
        // Predicated region
        $region89: #{recurrent_block_forward.1} parent=79 // pred_check
          %p1651 = pneg %p322
        $region90: #{recurrent_block_forward.1} parent=79 // pred_check_branch
          %1653 = sbr.rel (%p1651) target = $region92
        $region91: #{recurrent_block_forward.1} parent=79 // pred_region
          %s1654 = sand.u32 %s307, 1
          %s1655 = scalar_lea.sflag [#allocation9], %s1654
          %s1656 = sand.u32 %s307, 1
          %s1657 = scalar_lea.vmem [#allocation8], %s1656
          %1658 = dma.done %s1655, 16
        $region92: #{recurrent_block_forward.1} parent=79 // pred_fallthru
          _
      $region80: #{recurrent_block_forward.1} parent=5 // pred_fallthru
        _
    $region6: #{recurrent_block_forward.1} parent=1 // loop_footer
      %s28 = sadd.s32 1, %s24
    $region7: #{recurrent_block_forward.1} parent=1 // loop_footer_branch
      %23 = sbr.rel target = $region3
    $region8: #{recurrent_block_forward.1} parent=1 // loop_exit
      _
    %1659 = vsyncpa [#allocation7], 1
    %s1660 = scalar_lea.sflag [#allocation7], 1
    %1661 = vsyncpa %s1660, 1
    %1662 = vsyncpa [#allocation9], 1
    %s1663 = scalar_lea.sflag [#allocation9], 1
    %1664 = vsyncpa %s1663, 1

</llo_original>
